<compile_context>
chip_gen: v7x
topology: tpu7x:2x2x1
jax: 0.10.0
libtpu: 0.0.40
codegen_flags: <defaults>
</compile_context>

<pallas_src>
import math

import jax
import jax.numpy as jnp
import numpy as np
from jax.experimental import pallas as pl
from jax.experimental.pallas import tpu as pltpu

N_EMBD = 32
N_HEAD = 2
LN_EPS = 1e-5          # torch.nn.LayerNorm default eps
MASK_VALUE = -10000.0  # matches the module's masked-fill value


def _erf(z):
    # Abramowitz & Stegun 7.1.26 rational approximation (|err| < 1.5e-7).
    # Kept instead of lax.erf so the kernel only needs exp/mul/where (guaranteed
    # Mosaic lowerings, EUP + VPU); matches PyTorch's exact erf-based nn.GELU
    # to ~1e-7, well inside the 5e-5 test tolerance.
    a1, a2, a3, a4, a5 = (0.254829592, -0.284496736, 1.421413741,
                          -1.453152027, 1.061405429)
    p = 0.3275911
    za = jnp.abs(z)
    t = 1.0 / (1.0 + p * za)
    poly = ((((a5 * t + a4) * t + a3) * t + a2) * t + a1) * t
    pos = 1.0 - poly * jnp.exp(-za * za)
    return jnp.where(z >= 0.0, pos, -pos)


def _gelu_exact(x):
    # PyTorch nn.GELU() default: 0.5 * x * (1 + erf(x / sqrt(2)))
    return 0.5 * x * (1.0 + _erf(x * (1.0 / math.sqrt(2.0))))


def _layer_norm(x, gamma, beta):
    mu = jnp.mean(x, axis=-1, keepdims=True)
    var = jnp.mean(jnp.square(x - mu), axis=-1, keepdims=True)
    return (x - mu) * jax.lax.rsqrt(var + LN_EPS) * gamma + beta


def encode_block_kernel(x_ref, m_ref, w_ref, vec_ref, o_ref):
    """Whole EncodeBlock forward in a single invocation (all operands in VMEM).

    x_ref  : (B*L, D)       activations (flattened batch*seq)
    m_ref  : (B, L)         padding mask (1 = valid, 0 = padded)
    w_ref  : (4H+2, D, D)   weight slab, leading-index reads only:
               [0 .. H)     per-head Q weights (cols zero-padded hd -> D)
               [H .. 2H)    per-head K weights
               [2H .. 3H)   per-head V weights
               [3H .. 4H)   per-head proj weights (rows zero-padded hd -> D)
               4H, 4H+1     FFN1^T, FFN2^T
    vec_ref: (3H+7, D)      bias / LN-param slab:
               [0 .. 3H)    per-head q/k/v biases (zero-padded hd -> D)
               3H .. 3H+6   b_proj, ln1_g, ln1_b, b_ffn1, b_ffn2, ln2_g, ln2_b
    o_ref  : (B*L, D)
    """
    B, L = m_ref.shape
    BL, D = x_ref.shape
    H = N_HEAD
    hd = D // H
    scale = 1.0 / math.sqrt(hd)

    x2d = x_ref[...].astype(jnp.float32)                        # (BL, D)

    def vec(i):                                                  # (1, D) row
        return vec_ref[i:i + 1, :]

    # Masks, computed once and reused across heads.
    row = jax.lax.broadcasted_iota(jnp.int32, (L, L), 0)
    col = jax.lax.broadcasted_iota(jnp.int32, (L, L), 1)
    causal = (col <= row)[None, :, :]                            # (1, L, L)
    m = m_ref[...].astype(jnp.float32)                           # (B, L)
    add_mask = (1.0 - m)[:, None, :] * MASK_VALUE                # (B, 1, L)

    # Attention: per-head matmuls against pre-split zero-padded weight blocks.
    # Padded feature columns are zero in both q and k (and v), so score / value
    # contractions over D equal the true hd-dim contractions.  Head outputs are
    # folded directly into the output projection: y @ Wp == sum_h y_h @ Wp_h.
    att = jnp.zeros((BL, D), jnp.float32)
    for h in range(H):
        q_h = (jnp.dot(x2d, w_ref[h], preferred_element_type=jnp.float32)
               + vec(h)).reshape(B, L, D)
        k_h = (jnp.dot(x2d, w_ref[H + h], preferred_element_type=jnp.float32)
               + vec(H + h)).reshape(B, L, D)
        v_h = (jnp.dot(x2d, w_ref[2 * H + h], preferred_element_type=jnp.float32)
               + vec(2 * H + h)).reshape(B, L, D)
        s = jnp.einsum('bld,bmd->blm', q_h, k_h,
                       preferred_element_type=jnp.float32) * scale
        s = jnp.where(causal, s, MASK_VALUE) + add_mask
        s = s - jnp.max(s, axis=-1, keepdims=True)
        p = jnp.exp(s)
        p = p / jnp.sum(p, axis=-1, keepdims=True)
        y_h = jnp.einsum('blm,bmd->bld', p, v_h,
                         preferred_element_type=jnp.float32).reshape(BL, D)
        att = att + jnp.dot(y_h, w_ref[3 * H + h],
                            preferred_element_type=jnp.float32)

    # Output projection bias + residual + LN1.
    x1 = _layer_norm(x2d + att + vec(3 * H), vec(3 * H + 1), vec(3 * H + 2))

    # FFN (Linear -> exact GELU -> Linear) + residual + LN2.
    h1 = _gelu_exact(jnp.dot(x1, w_ref[4 * H],
                             preferred_element_type=jnp.float32) + vec(3 * H + 3))
    f = jnp.dot(h1, w_ref[4 * H + 1],
                preferred_element_type=jnp.float32) + vec(3 * H + 4)
    out = _layer_norm(x1 + f, vec(3 * H + 5), vec(3 * H + 6))

    # Single bulk writeback of the full (B*L, D) block.
    o_ref[...] = out.astype(o_ref.dtype)


def encode_block_pallas(x, m, params):
    """EncodeBlock.forward((x, m)) -> (x_out, m).  x: (B, L, D), m: (B, L)."""
    B, L, D = x.shape
    H, hd = N_HEAD, D // N_HEAD

    # One-time wrapper-side packing into two slabs: 4 operands / 4 DMAs total,
    # and every in-kernel weight/bias access is a leading-index read.
    def pad_cols(w):   # (D, hd) -> (D, D), zero-pad output-feature columns
        return jnp.pad(w, ((0, 0), (0, D - w.shape[1])))

    def pad_rows(w):   # (hd, D) -> (D, D), zero-pad input-feature rows
        return jnp.pad(w, ((0, D - w.shape[0]), (0, 0)))

    def pad_vec(v):    # (hd,) -> (D,)
        return jnp.pad(v, (0, D - v.shape[0]))

    wq_t, wk_t, wv_t, wp_t = (params['wq'].T, params['wk'].T,
                              params['wv'].T, params['wp'].T)
    mats = []
    for w_t in (wq_t, wk_t, wv_t):                     # per-head Q/K/V blocks
        mats += [pad_cols(w_t[:, h * hd:(h + 1) * hd]) for h in range(H)]
    mats += [pad_rows(wp_t[h * hd:(h + 1) * hd, :]) for h in range(H)]
    mats += [params['w1'].T, params['w2'].T]
    w_slab = jnp.stack(mats).astype(jnp.float32)       # (4H+2, D, D)

    vecs = []
    for b in ('bq', 'bk', 'bv'):
        vecs += [pad_vec(params[b][h * hd:(h + 1) * hd]) for h in range(H)]
    vecs += [params['bp'], params['g1'], params['be1'], params['bf1'],
             params['bf2'], params['g2'], params['be2']]
    vec_slab = jnp.stack(vecs).astype(jnp.float32)     # (3H+7, D)

    vmem_spec = pl.BlockSpec(memory_space=pltpu.MemorySpace.VMEM)
    out2d = pl.pallas_call(
        encode_block_kernel,
        out_shape=jax.ShapeDtypeStruct((B * L, D), x.dtype),
        in_specs=[vmem_spec, vmem_spec, vmem_spec, vmem_spec],
        out_specs=vmem_spec,
    )(x.reshape(B * L, D), m, w_slab, vec_slab)
    return out2d.reshape(B, L, D), m


def encode_block_ref(x, m, params):
    """Pure-JAX reference mirroring the PyTorch EncodeBlock.forward exactly."""
    B, L, D = x.shape
    H, hd = N_HEAD, D // N_HEAD

    def linear(a, w, b):       # w: (out, in) like torch.nn.Linear
        return a @ w.T + b

    q = linear(x, params['wq'], params['bq']).reshape(B, L, H, hd).transpose(0, 2, 1, 3)
    k = linear(x, params['wk'], params['bk']).reshape(B, L, H, hd).transpose(0, 2, 1, 3)
    v = linear(x, params['wv'], params['bv']).reshape(B, L, H, hd).transpose(0, 2, 1, 3)

    att = jnp.matmul(q, jnp.swapaxes(k, -2, -1)) * (1.0 / math.sqrt(hd))   # (B,H,L,L)
    causal = jnp.tril(jnp.ones((1, 1, L, L), dtype=bool))
    att = jnp.where(causal, att, MASK_VALUE)
    att = att + (1.0 - m)[:, None, None, :] * MASK_VALUE
    att = jax.nn.softmax(att, axis=-1)
    y = jnp.matmul(att, v).transpose(0, 2, 1, 3).reshape(B, L, D)
    y = linear(y, params['wp'], params['bp'])

    def ln(a, g, b):
        mu = jnp.mean(a, axis=-1, keepdims=True)
        var = jnp.mean(jnp.square(a - mu), axis=-1, keepdims=True)
        return (a - mu) * jax.lax.rsqrt(var + LN_EPS) * g + b

    x1 = ln(x + y, params['g1'], params['be1'])
    h = jax.nn.gelu(linear(x1, params['w1'], params['bf1']), approximate=False)
    f = linear(h, params['w2'], params['bf2'])
    out = ln(x1 + f, params['g2'], params['be2'])
    return out, m


if __name__ == "__main__":
    B, L, D = 2, 8, N_EMBD

    key = jax.random.PRNGKey(0)
    ks = jax.random.split(key, 18)

    def rnd(k, shape, scale=0.1):
        return scale * jax.random.normal(k, shape, jnp.float32)

    params = dict(
        wq=rnd(ks[0], (D, D)), bq=rnd(ks[1], (D,)),
        wk=rnd(ks[2], (D, D)), bk=rnd(ks[3], (D,)),
        wv=rnd(ks[4], (D, D)), bv=rnd(ks[5], (D,)),
        wp=rnd(ks[6], (D, D)), bp=rnd(ks[7], (D,)),
        g1=1.0 + rnd(ks[8], (D,)), be1=rnd(ks[9], (D,)),
        w1=rnd(ks[10], (D, D), scale=0.3), bf1=rnd(ks[11], (D,)),
        w2=rnd(ks[12], (D, D)), bf2=rnd(ks[13], (D,)),
        g2=1.0 + rnd(ks[14], (D,)), be2=rnd(ks[15], (D,)),
    )

    x = jax.random.normal(ks[16], (B, L, D), jnp.float32)
    # Padding mask m: 1 = valid token, 0 = padded (last two tokens of batch 1).
    m = jnp.ones((B, L), jnp.float32).at[1, L - 2:].set(0.0)

    out, m_out = encode_block_pallas(x, m, params)
    out = jax.block_until_ready(out)

    with jax.default_matmul_precision("float32"):
        ref, _ = encode_block_ref(x, m, params)
    ref = jax.block_until_ready(ref)

    assert out.shape == (B, L, D), out.shape
    np.testing.assert_allclose(np.asarray(out), np.asarray(ref),
                               atol=5e-5, rtol=5e-5)
    print("KERNEL_OK")
</pallas_src>

<mosaic_0001>
module attributes {stable_mosaic.version = 11 : i64} {
  func.func @encode_block_kernel(%arg0: memref<16x32xf32, #tpu.memory_space<vmem>>, %arg1: memref<2x8xf32, #tpu.memory_space<vmem>>, %arg2: memref<10x32x32xf32, #tpu.memory_space<vmem>>, %arg3: memref<13x32xf32, #tpu.memory_space<vmem>>, %arg4: memref<16x32xf32, #tpu.memory_space<vmem>>) attributes {dimension_semantics = [], scalar_prefetch = 0 : i64, scratch_operands = 0 : i64, tpu.core_type = #tpu.core_type<tc>} {
    %c0 = arith.constant 0 : index
    %c0_0 = arith.constant 0 : index
    %0 = vector.load %arg0[%c0, %c0_0] : memref<16x32xf32, #tpu.memory_space<vmem>>, vector<16x32xf32>
    %1 = tpu.iota {dimensions = array<i32: 0>} : vector<8x8xi32>
    %2 = tpu.iota {dimensions = array<i32: 1>} : vector<8x8xi32>
    %3 = arith.cmpi sle, %2, %1 : vector<8x8xi32>
    %4 = vector.shape_cast %3 : vector<8x8xi1> to vector<1x8x8xi1>
    %c0_1 = arith.constant 0 : index
    %c0_2 = arith.constant 0 : index
    %5 = vector.load %arg1[%c0_1, %c0_2] : memref<2x8xf32, #tpu.memory_space<vmem>>, vector<2x8xf32>
    %cst = arith.constant 1.000000e+00 : f32
    %6 = vector.broadcast %cst : f32 to vector<2x8xf32>
    %7 = arith.subf %6, %5 : vector<2x8xf32>
    %8 = vector.shape_cast %7 : vector<2x8xf32> to vector<2x1x8xf32>
    %cst_3 = arith.constant -1.000000e+04 : f32
    %9 = vector.broadcast %cst_3 : f32 to vector<2x1x8xf32>
    %10 = arith.mulf %8, %9 : vector<2x1x8xf32>
    %cst_4 = arith.constant 0.000000e+00 : f32
    %11 = vector.broadcast %cst_4 : f32 to vector<16x32xf32>
    %c0_5 = arith.constant 0 : index
    %c0_6 = arith.constant 0 : index
    %c0_7 = arith.constant 0 : index
    %12 = vector.load %arg2[%c0_5, %c0_6, %c0_7] : memref<10x32x32xf32, #tpu.memory_space<vmem>>, vector<1x32x32xf32>
    %13 = vector.shape_cast %12 : vector<1x32x32xf32> to vector<32x32xf32>
    %cst_8 = arith.constant dense<0.000000e+00> : vector<16x32xf32>
    %14 = tpu.matmul %0, %13, %cst_8 {dimension_numbers = #tpu.dot_dimension_numbers<[1], [0], [0], [1], [0, 0, 1, 1], [], []>} : vector<16x32xf32>, vector<32x32xf32>, vector<16x32xf32> -> vector<16x32xf32>
    %c0_9 = arith.constant 0 : index
    %c0_10 = arith.constant 0 : index
    %15 = vector.load %arg3[%c0_9, %c0_10] : memref<13x32xf32, #tpu.memory_space<vmem>>, vector<1x32xf32>
    %16 = vector.broadcast %15 : vector<1x32xf32> to vector<16x32xf32>
    %17 = arith.addf %14, %16 : vector<16x32xf32>
    %18 = vector.shape_cast %17 : vector<16x32xf32> to vector<2x8x32xf32>
    %c2 = arith.constant 2 : index
    %c0_11 = arith.constant 0 : index
    %c0_12 = arith.constant 0 : index
    %19 = vector.load %arg2[%c2, %c0_11, %c0_12] : memref<10x32x32xf32, #tpu.memory_space<vmem>>, vector<1x32x32xf32>
    %20 = vector.shape_cast %19 : vector<1x32x32xf32> to vector<32x32xf32>
    %cst_13 = arith.constant dense<0.000000e+00> : vector<16x32xf32>
    %21 = tpu.matmul %0, %20, %cst_13 {dimension_numbers = #tpu.dot_dimension_numbers<[1], [0], [0], [1], [0, 0, 1, 1], [], []>} : vector<16x32xf32>, vector<32x32xf32>, vector<16x32xf32> -> vector<16x32xf32>
    %c2_14 = arith.constant 2 : index
    %c0_15 = arith.constant 0 : index
    %22 = vector.load %arg3[%c2_14, %c0_15] : memref<13x32xf32, #tpu.memory_space<vmem>>, vector<1x32xf32>
    %23 = vector.broadcast %22 : vector<1x32xf32> to vector<16x32xf32>
    %24 = arith.addf %21, %23 : vector<16x32xf32>
    %25 = vector.shape_cast %24 : vector<16x32xf32> to vector<2x8x32xf32>
    %c4 = arith.constant 4 : index
    %c0_16 = arith.constant 0 : index
    %c0_17 = arith.constant 0 : index
    %26 = vector.load %arg2[%c4, %c0_16, %c0_17] : memref<10x32x32xf32, #tpu.memory_space<vmem>>, vector<1x32x32xf32>
    %27 = vector.shape_cast %26 : vector<1x32x32xf32> to vector<32x32xf32>
    %cst_18 = arith.constant dense<0.000000e+00> : vector<16x32xf32>
    %28 = tpu.matmul %0, %27, %cst_18 {dimension_numbers = #tpu.dot_dimension_numbers<[1], [0], [0], [1], [0, 0, 1, 1], [], []>} : vector<16x32xf32>, vector<32x32xf32>, vector<16x32xf32> -> vector<16x32xf32>
    %c4_19 = arith.constant 4 : index
    %c0_20 = arith.constant 0 : index
    %29 = vector.load %arg3[%c4_19, %c0_20] : memref<13x32xf32, #tpu.memory_space<vmem>>, vector<1x32xf32>
    %30 = vector.broadcast %29 : vector<1x32xf32> to vector<16x32xf32>
    %31 = arith.addf %28, %30 : vector<16x32xf32>
    %32 = vector.shape_cast %31 : vector<16x32xf32> to vector<2x8x32xf32>
    "tpu.trace_start"() <{level = 10 : i32, message = "bld,bmd->blm"}> : () -> ()
    %cst_21 = arith.constant dense<0.000000e+00> : vector<2x8x8xf32>
    %33 = tpu.matmul %18, %25, %cst_21 {dimension_numbers = #tpu.dot_dimension_numbers<[2], [2], [1], [1], [0, 0, 0, 1, 1, 1], [0], [0]>} : vector<2x8x32xf32>, vector<2x8x32xf32>, vector<2x8x8xf32> -> vector<2x8x8xf32>
    "tpu.trace_stop"() : () -> ()
    %cst_22 = arith.constant 2.500000e-01 : f32
    %34 = vector.broadcast %cst_22 : f32 to vector<2x8x8xf32>
    %35 = arith.mulf %33, %34 : vector<2x8x8xf32>
    %cst_23 = arith.constant -1.000000e+04 : f32
    %36 = vector.shape_cast %4 : vector<1x8x8xi1> to vector<1x8x8xi1>
    %37 = vector.broadcast %36 : vector<1x8x8xi1> to vector<2x8x8xi1>
    %38 = vector.broadcast %cst_23 : f32 to vector<2x8x8xf32>
    %39 = arith.select %37, %35, %38 : vector<2x8x8xi1>, vector<2x8x8xf32>
    %40 = vector.broadcast %10 : vector<2x1x8xf32> to vector<2x8x8xf32>
    %41 = arith.addf %39, %40 : vector<2x8x8xf32>
    %cst_24 = arith.constant dense<0xFF800000> : vector<2x8xf32>
    %42 = vector.multi_reduction <maximumf>, %41, %cst_24 [2] : vector<2x8x8xf32> to vector<2x8xf32>
    %43 = vector.shape_cast %42 : vector<2x8xf32> to vector<2x8x1xf32>
    %44 = vector.broadcast %43 : vector<2x8x1xf32> to vector<2x8x8xf32>
    %45 = arith.subf %41, %44 : vector<2x8x8xf32>
    %46 = math.exp %45 : vector<2x8x8xf32>
    %cst_25 = arith.constant dense<0.000000e+00> : vector<2x8xf32>
    %47 = vector.multi_reduction <add>, %46, %cst_25 [2] : vector<2x8x8xf32> to vector<2x8xf32>
    %48 = vector.shape_cast %47 : vector<2x8xf32> to vector<2x8x1xf32>
    %49 = vector.broadcast %48 : vector<2x8x1xf32> to vector<2x8x8xf32>
    %50 = arith.divf %46, %49 : vector<2x8x8xf32>
    "tpu.trace_start"() <{level = 10 : i32, message = "blm,bmd->bld"}> : () -> ()
    %cst_26 = arith.constant dense<0.000000e+00> : vector<2x8x32xf32>
    %51 = tpu.matmul %50, %32, %cst_26 {dimension_numbers = #tpu.dot_dimension_numbers<[2], [1], [1], [2], [0, 0, 0, 1, 1, 2], [0], [0]>} : vector<2x8x8xf32>, vector<2x8x32xf32>, vector<2x8x32xf32> -> vector<2x8x32xf32>
    "tpu.trace_stop"() : () -> ()
    %52 = vector.shape_cast %51 : vector<2x8x32xf32> to vector<16x32xf32>
    %c6 = arith.constant 6 : index
    %c0_27 = arith.constant 0 : index
    %c0_28 = arith.constant 0 : index
    %53 = vector.load %arg2[%c6, %c0_27, %c0_28] : memref<10x32x32xf32, #tpu.memory_space<vmem>>, vector<1x32x32xf32>
    %54 = vector.shape_cast %53 : vector<1x32x32xf32> to vector<32x32xf32>
    %cst_29 = arith.constant dense<0.000000e+00> : vector<16x32xf32>
    %55 = tpu.matmul %52, %54, %cst_29 {dimension_numbers = #tpu.dot_dimension_numbers<[1], [0], [0], [1], [0, 0, 1, 1], [], []>} : vector<16x32xf32>, vector<32x32xf32>, vector<16x32xf32> -> vector<16x32xf32>
    %56 = arith.addf %11, %55 : vector<16x32xf32>
    %c1 = arith.constant 1 : index
    %c0_30 = arith.constant 0 : index
    %c0_31 = arith.constant 0 : index
    %57 = vector.load %arg2[%c1, %c0_30, %c0_31] : memref<10x32x32xf32, #tpu.memory_space<vmem>>, vector<1x32x32xf32>
    %58 = vector.shape_cast %57 : vector<1x32x32xf32> to vector<32x32xf32>
    %cst_32 = arith.constant dense<0.000000e+00> : vector<16x32xf32>
    %59 = tpu.matmul %0, %58, %cst_32 {dimension_numbers = #tpu.dot_dimension_numbers<[1], [0], [0], [1], [0, 0, 1, 1], [], []>} : vector<16x32xf32>, vector<32x32xf32>, vector<16x32xf32> -> vector<16x32xf32>
    %c1_33 = arith.constant 1 : index
    %c0_34 = arith.constant 0 : index
    %60 = vector.load %arg3[%c1_33, %c0_34] : memref<13x32xf32, #tpu.memory_space<vmem>>, vector<1x32xf32>
    %61 = vector.broadcast %60 : vector<1x32xf32> to vector<16x32xf32>
    %62 = arith.addf %59, %61 : vector<16x32xf32>
    %63 = vector.shape_cast %62 : vector<16x32xf32> to vector<2x8x32xf32>
    %c3 = arith.constant 3 : index
    %c0_35 = arith.constant 0 : index
    %c0_36 = arith.constant 0 : index
    %64 = vector.load %arg2[%c3, %c0_35, %c0_36] : memref<10x32x32xf32, #tpu.memory_space<vmem>>, vector<1x32x32xf32>
    %65 = vector.shape_cast %64 : vector<1x32x32xf32> to vector<32x32xf32>
    %cst_37 = arith.constant dense<0.000000e+00> : vector<16x32xf32>
    %66 = tpu.matmul %0, %65, %cst_37 {dimension_numbers = #tpu.dot_dimension_numbers<[1], [0], [0], [1], [0, 0, 1, 1], [], []>} : vector<16x32xf32>, vector<32x32xf32>, vector<16x32xf32> -> vector<16x32xf32>
    %c3_38 = arith.constant 3 : index
    %c0_39 = arith.constant 0 : index
    %67 = vector.load %arg3[%c3_38, %c0_39] : memref<13x32xf32, #tpu.memory_space<vmem>>, vector<1x32xf32>
    %68 = vector.broadcast %67 : vector<1x32xf32> to vector<16x32xf32>
    %69 = arith.addf %66, %68 : vector<16x32xf32>
    %70 = vector.shape_cast %69 : vector<16x32xf32> to vector<2x8x32xf32>
    %c5 = arith.constant 5 : index
    %c0_40 = arith.constant 0 : index
    %c0_41 = arith.constant 0 : index
    %71 = vector.load %arg2[%c5, %c0_40, %c0_41] : memref<10x32x32xf32, #tpu.memory_space<vmem>>, vector<1x32x32xf32>
    %72 = vector.shape_cast %71 : vector<1x32x32xf32> to vector<32x32xf32>
    %cst_42 = arith.constant dense<0.000000e+00> : vector<16x32xf32>
    %73 = tpu.matmul %0, %72, %cst_42 {dimension_numbers = #tpu.dot_dimension_numbers<[1], [0], [0], [1], [0, 0, 1, 1], [], []>} : vector<16x32xf32>, vector<32x32xf32>, vector<16x32xf32> -> vector<16x32xf32>
    %c5_43 = arith.constant 5 : index
    %c0_44 = arith.constant 0 : index
    %74 = vector.load %arg3[%c5_43, %c0_44] : memref<13x32xf32, #tpu.memory_space<vmem>>, vector<1x32xf32>
    %75 = vector.broadcast %74 : vector<1x32xf32> to vector<16x32xf32>
    %76 = arith.addf %73, %75 : vector<16x32xf32>
    %77 = vector.shape_cast %76 : vector<16x32xf32> to vector<2x8x32xf32>
    "tpu.trace_start"() <{level = 10 : i32, message = "bld,bmd->blm"}> : () -> ()
    %cst_45 = arith.constant dense<0.000000e+00> : vector<2x8x8xf32>
    %78 = tpu.matmul %63, %70, %cst_45 {dimension_numbers = #tpu.dot_dimension_numbers<[2], [2], [1], [1], [0, 0, 0, 1, 1, 1], [0], [0]>} : vector<2x8x32xf32>, vector<2x8x32xf32>, vector<2x8x8xf32> -> vector<2x8x8xf32>
    "tpu.trace_stop"() : () -> ()
    %cst_46 = arith.constant 2.500000e-01 : f32
    %79 = vector.broadcast %cst_46 : f32 to vector<2x8x8xf32>
    %80 = arith.mulf %78, %79 : vector<2x8x8xf32>
    %cst_47 = arith.constant -1.000000e+04 : f32
    %81 = vector.shape_cast %4 : vector<1x8x8xi1> to vector<1x8x8xi1>
    %82 = vector.broadcast %81 : vector<1x8x8xi1> to vector<2x8x8xi1>
    %83 = vector.broadcast %cst_47 : f32 to vector<2x8x8xf32>
    %84 = arith.select %82, %80, %83 : vector<2x8x8xi1>, vector<2x8x8xf32>
    %85 = vector.broadcast %10 : vector<2x1x8xf32> to vector<2x8x8xf32>
    %86 = arith.addf %84, %85 : vector<2x8x8xf32>
    %cst_48 = arith.constant dense<0xFF800000> : vector<2x8xf32>
    %87 = vector.multi_reduction <maximumf>, %86, %cst_48 [2] : vector<2x8x8xf32> to vector<2x8xf32>
    %88 = vector.shape_cast %87 : vector<2x8xf32> to vector<2x8x1xf32>
    %89 = vector.broadcast %88 : vector<2x8x1xf32> to vector<2x8x8xf32>
    %90 = arith.subf %86, %89 : vector<2x8x8xf32>
    %91 = math.exp %90 : vector<2x8x8xf32>
    %cst_49 = arith.constant dense<0.000000e+00> : vector<2x8xf32>
    %92 = vector.multi_reduction <add>, %91, %cst_49 [2] : vector<2x8x8xf32> to vector<2x8xf32>
    %93 = vector.shape_cast %92 : vector<2x8xf32> to vector<2x8x1xf32>
    %94 = vector.broadcast %93 : vector<2x8x1xf32> to vector<2x8x8xf32>
    %95 = arith.divf %91, %94 : vector<2x8x8xf32>
    "tpu.trace_start"() <{level = 10 : i32, message = "blm,bmd->bld"}> : () -> ()
    %cst_50 = arith.constant dense<0.000000e+00> : vector<2x8x32xf32>
    %96 = tpu.matmul %95, %77, %cst_50 {dimension_numbers = #tpu.dot_dimension_numbers<[2], [1], [1], [2], [0, 0, 0, 1, 1, 2], [0], [0]>} : vector<2x8x8xf32>, vector<2x8x32xf32>, vector<2x8x32xf32> -> vector<2x8x32xf32>
    "tpu.trace_stop"() : () -> ()
    %97 = vector.shape_cast %96 : vector<2x8x32xf32> to vector<16x32xf32>
    %c7 = arith.constant 7 : index
    %c0_51 = arith.constant 0 : index
    %c0_52 = arith.constant 0 : index
    %98 = vector.load %arg2[%c7, %c0_51, %c0_52] : memref<10x32x32xf32, #tpu.memory_space<vmem>>, vector<1x32x32xf32>
    %99 = vector.shape_cast %98 : vector<1x32x32xf32> to vector<32x32xf32>
    %cst_53 = arith.constant dense<0.000000e+00> : vector<16x32xf32>
    %100 = tpu.matmul %97, %99, %cst_53 {dimension_numbers = #tpu.dot_dimension_numbers<[1], [0], [0], [1], [0, 0, 1, 1], [], []>} : vector<16x32xf32>, vector<32x32xf32>, vector<16x32xf32> -> vector<16x32xf32>
    %101 = arith.addf %56, %100 : vector<16x32xf32>
    %102 = arith.addf %0, %101 : vector<16x32xf32>
    %c6_54 = arith.constant 6 : index
    %c0_55 = arith.constant 0 : index
    %103 = vector.load %arg3[%c6_54, %c0_55] : memref<13x32xf32, #tpu.memory_space<vmem>>, vector<1x32xf32>
    %104 = vector.broadcast %103 : vector<1x32xf32> to vector<16x32xf32>
    %105 = arith.addf %102, %104 : vector<16x32xf32>
    %c7_56 = arith.constant 7 : index
    %c0_57 = arith.constant 0 : index
    %106 = vector.load %arg3[%c7_56, %c0_57] : memref<13x32xf32, #tpu.memory_space<vmem>>, vector<1x32xf32>
    %c8 = arith.constant 8 : index
    %c0_58 = arith.constant 0 : index
    %107 = vector.load %arg3[%c8, %c0_58] : memref<13x32xf32, #tpu.memory_space<vmem>>, vector<1x32xf32>
    %cst_59 = arith.constant dense<0.000000e+00> : vector<16xf32>
    %108 = vector.multi_reduction <add>, %105, %cst_59 [1] : vector<16x32xf32> to vector<16xf32>
    %109 = vector.shape_cast %108 : vector<16xf32> to vector<16x1xf32>
    %cst_60 = arith.constant 3.200000e+01 : f32
    %110 = vector.broadcast %cst_60 : f32 to vector<16x1xf32>
    %111 = arith.divf %109, %110 : vector<16x1xf32>
    %112 = vector.broadcast %111 : vector<16x1xf32> to vector<16x32xf32>
    %113 = arith.subf %105, %112 : vector<16x32xf32>
    %114 = arith.mulf %113, %113 : vector<16x32xf32>
    %cst_61 = arith.constant dense<0.000000e+00> : vector<16xf32>
    %115 = vector.multi_reduction <add>, %114, %cst_61 [1] : vector<16x32xf32> to vector<16xf32>
    %116 = vector.shape_cast %115 : vector<16xf32> to vector<16x1xf32>
    %cst_62 = arith.constant 3.200000e+01 : f32
    %117 = vector.broadcast %cst_62 : f32 to vector<16x1xf32>
    %118 = arith.divf %116, %117 : vector<16x1xf32>
    %119 = vector.broadcast %111 : vector<16x1xf32> to vector<16x32xf32>
    %120 = arith.subf %105, %119 : vector<16x32xf32>
    %cst_63 = arith.constant 9.99999974E-6 : f32
    %121 = vector.broadcast %cst_63 : f32 to vector<16x1xf32>
    %122 = arith.addf %118, %121 : vector<16x1xf32>
    %123 = math.rsqrt %122 : vector<16x1xf32>
    %124 = vector.broadcast %123 : vector<16x1xf32> to vector<16x32xf32>
    %125 = arith.mulf %120, %124 : vector<16x32xf32>
    %126 = vector.broadcast %106 : vector<1x32xf32> to vector<16x32xf32>
    %127 = arith.mulf %125, %126 : vector<16x32xf32>
    %128 = vector.broadcast %107 : vector<1x32xf32> to vector<16x32xf32>
    %129 = arith.addf %127, %128 : vector<16x32xf32>
    %c8_64 = arith.constant 8 : index
    %c0_65 = arith.constant 0 : index
    %c0_66 = arith.constant 0 : index
    %130 = vector.load %arg2[%c8_64, %c0_65, %c0_66] : memref<10x32x32xf32, #tpu.memory_space<vmem>>, vector<1x32x32xf32>
    %131 = vector.shape_cast %130 : vector<1x32x32xf32> to vector<32x32xf32>
    %cst_67 = arith.constant dense<0.000000e+00> : vector<16x32xf32>
    %132 = tpu.matmul %129, %131, %cst_67 {dimension_numbers = #tpu.dot_dimension_numbers<[1], [0], [0], [1], [0, 0, 1, 1], [], []>} : vector<16x32xf32>, vector<32x32xf32>, vector<16x32xf32> -> vector<16x32xf32>
    %c9 = arith.constant 9 : index
    %c0_68 = arith.constant 0 : index
    %133 = vector.load %arg3[%c9, %c0_68] : memref<13x32xf32, #tpu.memory_space<vmem>>, vector<1x32xf32>
    %134 = vector.broadcast %133 : vector<1x32xf32> to vector<16x32xf32>
    %135 = arith.addf %132, %134 : vector<16x32xf32>
    %cst_69 = arith.constant 5.000000e-01 : f32
    %136 = vector.broadcast %cst_69 : f32 to vector<16x32xf32>
    %137 = arith.mulf %136, %135 : vector<16x32xf32>
    %cst_70 = arith.constant 0.707106769 : f32
    %138 = vector.broadcast %cst_70 : f32 to vector<16x32xf32>
    %139 = arith.mulf %135, %138 : vector<16x32xf32>
    %140 = math.absf %139 : vector<16x32xf32>
    %cst_71 = arith.constant 0.327591091 : f32
    %141 = vector.broadcast %cst_71 : f32 to vector<16x32xf32>
    %142 = arith.mulf %141, %140 : vector<16x32xf32>
    %cst_72 = arith.constant 1.000000e+00 : f32
    %143 = vector.broadcast %cst_72 : f32 to vector<16x32xf32>
    %144 = arith.addf %143, %142 : vector<16x32xf32>
    %cst_73 = arith.constant 1.000000e+00 : f32
    %145 = vector.broadcast %cst_73 : f32 to vector<16x32xf32>
    %146 = arith.divf %145, %144 : vector<16x32xf32>
    %cst_74 = arith.constant 1.06140542 : f32
    %147 = vector.broadcast %cst_74 : f32 to vector<16x32xf32>
    %148 = arith.mulf %147, %146 : vector<16x32xf32>
    %cst_75 = arith.constant -1.45315206 : f32
    %149 = vector.broadcast %cst_75 : f32 to vector<16x32xf32>
    %150 = arith.addf %148, %149 : vector<16x32xf32>
    %151 = arith.mulf %150, %146 : vector<16x32xf32>
    %cst_76 = arith.constant 1.42141378 : f32
    %152 = vector.broadcast %cst_76 : f32 to vector<16x32xf32>
    %153 = arith.addf %151, %152 : vector<16x32xf32>
    %154 = arith.mulf %153, %146 : vector<16x32xf32>
    %cst_77 = arith.constant -0.284496725 : f32
    %155 = vector.broadcast %cst_77 : f32 to vector<16x32xf32>
    %156 = arith.addf %154, %155 : vector<16x32xf32>
    %157 = arith.mulf %156, %146 : vector<16x32xf32>
    %cst_78 = arith.constant 0.254829586 : f32
    %158 = vector.broadcast %cst_78 : f32 to vector<16x32xf32>
    %159 = arith.addf %157, %158 : vector<16x32xf32>
    %160 = arith.mulf %159, %146 : vector<16x32xf32>
    %cst_79 = arith.constant 0.000000e+00 : f32
    %161 = vector.broadcast %cst_79 : f32 to vector<16x32xf32>
    %162 = arith.subf %161, %140 : vector<16x32xf32>
    %163 = arith.mulf %162, %140 : vector<16x32xf32>
    %164 = math.exp %163 : vector<16x32xf32>
    %165 = arith.mulf %160, %164 : vector<16x32xf32>
    %cst_80 = arith.constant 1.000000e+00 : f32
    %166 = vector.broadcast %cst_80 : f32 to vector<16x32xf32>
    %167 = arith.subf %166, %165 : vector<16x32xf32>
    %cst_81 = arith.constant 0.000000e+00 : f32
    %168 = vector.broadcast %cst_81 : f32 to vector<16x32xf32>
    %169 = arith.cmpf oge, %139, %168 : vector<16x32xf32>
    %cst_82 = arith.constant 0.000000e+00 : f32
    %170 = vector.broadcast %cst_82 : f32 to vector<16x32xf32>
    %171 = arith.subf %170, %167 : vector<16x32xf32>
    %172 = arith.select %169, %167, %171 : vector<16x32xi1>, vector<16x32xf32>
    %cst_83 = arith.constant 1.000000e+00 : f32
    %173 = vector.broadcast %cst_83 : f32 to vector<16x32xf32>
    %174 = arith.addf %173, %172 : vector<16x32xf32>
    %175 = arith.mulf %137, %174 : vector<16x32xf32>
    %c9_84 = arith.constant 9 : index
    %c0_85 = arith.constant 0 : index
    %c0_86 = arith.constant 0 : index
    %176 = vector.load %arg2[%c9_84, %c0_85, %c0_86] : memref<10x32x32xf32, #tpu.memory_space<vmem>>, vector<1x32x32xf32>
    %177 = vector.shape_cast %176 : vector<1x32x32xf32> to vector<32x32xf32>
    %cst_87 = arith.constant dense<0.000000e+00> : vector<16x32xf32>
    %178 = tpu.matmul %175, %177, %cst_87 {dimension_numbers = #tpu.dot_dimension_numbers<[1], [0], [0], [1], [0, 0, 1, 1], [], []>} : vector<16x32xf32>, vector<32x32xf32>, vector<16x32xf32> -> vector<16x32xf32>
    %c10 = arith.constant 10 : index
    %c0_88 = arith.constant 0 : index
    %179 = vector.load %arg3[%c10, %c0_88] : memref<13x32xf32, #tpu.memory_space<vmem>>, vector<1x32xf32>
    %180 = vector.broadcast %179 : vector<1x32xf32> to vector<16x32xf32>
    %181 = arith.addf %178, %180 : vector<16x32xf32>
    %182 = arith.addf %129, %181 : vector<16x32xf32>
    %c11 = arith.constant 11 : index
    %c0_89 = arith.constant 0 : index
    %183 = vector.load %arg3[%c11, %c0_89] : memref<13x32xf32, #tpu.memory_space<vmem>>, vector<1x32xf32>
    %c12 = arith.constant 12 : index
    %c0_90 = arith.constant 0 : index
    %184 = vector.load %arg3[%c12, %c0_90] : memref<13x32xf32, #tpu.memory_space<vmem>>, vector<1x32xf32>
    %cst_91 = arith.constant dense<0.000000e+00> : vector<16xf32>
    %185 = vector.multi_reduction <add>, %182, %cst_91 [1] : vector<16x32xf32> to vector<16xf32>
    %186 = vector.shape_cast %185 : vector<16xf32> to vector<16x1xf32>
    %cst_92 = arith.constant 3.200000e+01 : f32
    %187 = vector.broadcast %cst_92 : f32 to vector<16x1xf32>
    %188 = arith.divf %186, %187 : vector<16x1xf32>
    %189 = vector.broadcast %188 : vector<16x1xf32> to vector<16x32xf32>
    %190 = arith.subf %182, %189 : vector<16x32xf32>
    %191 = arith.mulf %190, %190 : vector<16x32xf32>
    %cst_93 = arith.constant dense<0.000000e+00> : vector<16xf32>
    %192 = vector.multi_reduction <add>, %191, %cst_93 [1] : vector<16x32xf32> to vector<16xf32>
    %193 = vector.shape_cast %192 : vector<16xf32> to vector<16x1xf32>
    %cst_94 = arith.constant 3.200000e+01 : f32
    %194 = vector.broadcast %cst_94 : f32 to vector<16x1xf32>
    %195 = arith.divf %193, %194 : vector<16x1xf32>
    %196 = vector.broadcast %188 : vector<16x1xf32> to vector<16x32xf32>
    %197 = arith.subf %182, %196 : vector<16x32xf32>
    %cst_95 = arith.constant 9.99999974E-6 : f32
    %198 = vector.broadcast %cst_95 : f32 to vector<16x1xf32>
    %199 = arith.addf %195, %198 : vector<16x1xf32>
    %200 = math.rsqrt %199 : vector<16x1xf32>
    %201 = vector.broadcast %200 : vector<16x1xf32> to vector<16x32xf32>
    %202 = arith.mulf %197, %201 : vector<16x32xf32>
    %203 = vector.broadcast %183 : vector<1x32xf32> to vector<16x32xf32>
    %204 = arith.mulf %202, %203 : vector<16x32xf32>
    %205 = vector.broadcast %184 : vector<1x32xf32> to vector<16x32xf32>
    %206 = arith.addf %204, %205 : vector<16x32xf32>
    %c0_96 = arith.constant 0 : index
    %c0_97 = arith.constant 0 : index
    %207 = vector.load %arg4[%c0_96, %c0_97] : memref<16x32xf32, #tpu.memory_space<vmem>>, vector<16x32xf32>
    tpu.vector_store %arg4[%c0_96, %c0_97], %206 {strides = array<i32>} : memref<16x32xf32, #tpu.memory_space<vmem>>, vector<16x32xf32>,
    return
  }
}

</mosaic_0001>

<llo_original>
// kernel: tpu_custom_call.1
$region0: #{tpu_custom_call.1}
  #allocation0 [shape = 'u32[]', space=smem, size = 0x4, offset = 0x4, fixed_abs, tag = 'smem constant byte address 0x4 - core index']
  #allocation1 [shape = 'u32[144,128]{1,0:T(1,128)}', space=vmem, size = 0x12000, scoped, tag = 'internal scratch']
  %s0 = inlined_call_operand.hbm [shape: f32[16,32], index: 0, kind: input, shape index: {}]
  %s1 = inlined_call_operand.vmem [shape: f32[2,8], index: 1, kind: input, shape index: {}]
  %s2 = inlined_call_operand.hbm [shape: f32[10,32,32], index: 2, kind: input, shape index: {}]
  %s3 = inlined_call_operand.hbm [shape: f32[13,32], index: 3, kind: input, shape index: {}]
  %s4 = inlined_call_operand.hbm [shape: f32[16,32], index: 4, kind: output, shape index: {}]
  %s5 = sld [smem:[#allocation0]]
  $region38: #{tpu_custom_call.1} parent=0
    _
  %s7 = ssub.s32 1, %s5
  %s8 = scalar_select 0, %s7, %s5
  $region1: #{tpu_custom_call.1} parent=0
    #allocation2 [shape = 'u8[8192]{0}', space=vmem, size = 0x2000, scoped, tag = 'input window, operand 0, single buffered']
    #allocation3 [shape = 's32[1]{0}', space=sflag, size = 0x4, scoped, tag = 'scoped memory for tpu_custom_call.1']
    #allocation4 [shape = 's32[1]{0}', space=sflag, size = 0x4, scoped, tag = 'scoped memory for tpu_custom_call.1']
    #allocation5 [shape = 'u8[163840]{0}', space=vmem, size = 0x28000, scoped, tag = 'input window, operand 2, single buffered']
    #allocation6 [shape = 's32[1]{0}', space=sflag, size = 0x4, scoped, tag = 'scoped memory for tpu_custom_call.1']
    #allocation7 [shape = 'u8[8192]{0}', space=vmem, size = 0x2000, scoped, tag = 'input window, operand 3, single buffered']
    #allocation8 [shape = 'u8[8192]{0}', space=vmem, size = 0x2000, scoped, tag = 'output window, operand 0, single buffered']
    %9 = vsyncpa [#allocation3], 0
    %10 = vsyncpa [#allocation6], 0
    %11 = vsyncpa [#allocation4], 0
    // Predicated region
    $region2: #{tpu_custom_call.1} parent=1 // pred_check
      _
    $region3: #{tpu_custom_call.1} parent=1 // pred_check_branch
      %13 = sbr.rel (0) target = $region5
    $region4: #{tpu_custom_call.1} parent=1 // pred_region
      %s15 = ssub.s32 256, 256
      %16 = vsyncadd [#allocation3], %s15
      %s17 = sshll.u32 [#allocation2], 4
      %s18 = int_to_ptr.vmem [resolvable:$true] %s17
      %23 = dma.hbm_to_vmem [thread:$0]  %s0, 256, %s18, [#allocation3], 128, 128, 8
    $region5: #{tpu_custom_call.1} parent=1 // pred_fallthru
      _
    // Predicated region
    $region6: #{tpu_custom_call.1} parent=1 // pred_check
      _
    $region7: #{tpu_custom_call.1} parent=1 // pred_check_branch
      %25 = sbr.rel (0) target = $region9
    $region8: #{tpu_custom_call.1} parent=1 // pred_region
      _
    $region9: #{tpu_custom_call.1} parent=1 // pred_fallthru
      _
    // Predicated region
    $region10: #{tpu_custom_call.1} parent=1 // pred_check
      _
    $region11: #{tpu_custom_call.1} parent=1 // pred_check_branch
      %27 = sbr.rel (0) target = $region13
    $region12: #{tpu_custom_call.1} parent=1 // pred_region
      %s29 = ssub.s32 5120, 5120
      %30 = vsyncadd [#allocation6], %s29
      %s31 = sshll.u32 [#allocation5], 4
      %s32 = int_to_ptr.vmem [resolvable:$true] %s31
      %37 = dma.hbm_to_vmem [thread:$0]  %s2, 5120, %s32, [#allocation6], 128, 128, 8
    $region13: #{tpu_custom_call.1} parent=1 // pred_fallthru
      _
    // Predicated region
    $region14: #{tpu_custom_call.1} parent=1 // pred_check
      _
    $region15: #{tpu_custom_call.1} parent=1 // pred_check_branch
      %39 = sbr.rel (0) target = $region17
    $region16: #{tpu_custom_call.1} parent=1 // pred_region
      %s41 = ssub.s32 256, 256
      %42 = vsyncadd [#allocation6], %s41
      %s43 = sshll.u32 [#allocation7], 4
      %s44 = int_to_ptr.vmem [resolvable:$true] %s43
      %49 = dma.hbm_to_vmem [thread:$0]  %s3, 256, %s44, [#allocation6], 128, 128, 8
    $region17: #{tpu_custom_call.1} parent=1 // pred_fallthru
      _
    // Predicated region
    $region18: #{tpu_custom_call.1} parent=1 // pred_check
      _
    $region19: #{tpu_custom_call.1} parent=1 // pred_check_branch
      %51 = sbr.rel (0) target = $region21
    $region20: #{tpu_custom_call.1} parent=1 // pred_region
      %52 = dma.done [#allocation3], 256
    $region21: #{tpu_custom_call.1} parent=1 // pred_fallthru
      _
    // Predicated region
    $region22: #{tpu_custom_call.1} parent=1 // pred_check
      _
    $region23: #{tpu_custom_call.1} parent=1 // pred_check_branch
      %54 = sbr.rel (0) target = $region25
    $region24: #{tpu_custom_call.1} parent=1 // pred_region
      %55 = dma.done [#allocation6], 5120
    $region25: #{tpu_custom_call.1} parent=1 // pred_fallthru
      _
    // Predicated region
    $region26: #{tpu_custom_call.1} parent=1 // pred_check
      _
    $region27: #{tpu_custom_call.1} parent=1 // pred_check_branch
      %57 = sbr.rel (0) target = $region29
    $region28: #{tpu_custom_call.1} parent=1 // pred_region
      %58 = dma.done [#allocation6], 256
    $region29: #{tpu_custom_call.1} parent=1 // pred_fallthru
      _
    %v59 = vld [vmem:[#allocation2] sm:$0xff]
    %v60 = vld [vmem:[#allocation2 + $0x8] sm:$0xff]
    %v61 = vlaneseq
    %v62 = vshrl.u32 %v61, 7
    %v63 = vlaneseq
    %v64 = vand.u32 %v63, 127
    %vm65 = vcmp.le.s32.totalorder %v64, %v62
    %v66 = vld [vmem:[%s1] sm:$0x3]
    %v67 = vsub.f32 1.0, %v66
    %v70 = vunpack.c.l.s4 1966171168
    %v71 = vunpack.c.0.s8 %v70
    %v72 = vlaneseq
    %v73 = vshrl.u32 %v72, 7
    %v74 = vsub.s32 %v71, %v73
    %v75 = vrot.slane %v67, %v74
    %v76 = vcombine.high %v75, %v75
    %v78 = vunpack.c.l.s4 1966171168
    %v79 = vunpack.c.0.s8 %v78
    %v80 = vlaneseq
    %v81 = vshrl.u32 %v80, 7
    %v82 = vsub.s32 %v79, %v81
    %v83 = vrot.slane %v75, %v82
    %v85 = vunpack.c.l.s4 1966171168
    %v86 = vunpack.c.0.s8 %v85
    %v87 = vlaneseq
    %v88 = vshrl.u32 %v87, 7
    %v89 = vsub.s32 %v86, %v88
    %v90 = vrot.slane %v76, %v89
    %v93 = vmul.f32 %v83, -10000.0
    %v94 = vmul.f32 %v90, -10000.0
    %v95 = vld [vmem:[#allocation5] sm:$0xff]
    %v96 = vld [vmem:[#allocation5 + $0x8] sm:$0xff]
    %v97 = vld [vmem:[#allocation5 + $0x10] sm:$0xff]
    %v98 = vld [vmem:[#allocation5 + $0x18] sm:$0xff]
    %v99 = vld [vmem:[#allocation7] sm:$0x1]
    %v100 = vlaneseq
    %v101 = vshrl.u32 %v100, 7
    %v102 = vsub.s32 0, %v101
    %v103 = vrot.slane %v99, %v102
    %vm104 = vcmask 261120
    %v106 = vsel %vm104, %v59, 0
    %v109 = vsel %vm104, %v60, 0
    %111 = vmatprep.subr.mxu0 0.0
    %112 = vmatpush1.msra.mxu0 %v95
    %113 = vmatprep.subr.mxu0 0.0
    %114 = vmatpush1.msra.mxu0 %v96
    %115 = vmatprep.subr.mxu0 0.0
    %116 = vmatpush1.msra.mxu0 %v97
    %117 = vmatprep.subr.mxu0 0.0
    %118 = vmatpush1.msra.mxu0 %v98
    %119 = vmatprep.subr.mxu0 0.0
    %120 = vmatpush1.msra.mxu0 0.0
    %121 = vmatprep.subr.mxu0 0.0
    %122 = vmatpush1.msra.mxu0 0.0
    %123 = vmatprep.subr.mxu0 0.0
    %124 = vmatpush1.msra.mxu0 0.0
    %125 = vmatprep.subr.mxu0 0.0
    %126 = vmatpush1.msra.mxu0 0.0
    %127 = vmatprep.subr.mxu0 0.0
    %128 = vmatpush1.msra.mxu0 0.0
    %129 = vmatprep.subr.mxu0 0.0
    %130 = vmatpush1.msra.mxu0 0.0
    %131 = vmatprep.subr.mxu0 0.0
    %132 = vmatpush1.msra.mxu0 0.0
    %133 = vmatprep.subr.mxu0 0.0
    %134 = vmatpush1.msra.mxu0 0.0
    %135 = vmatprep.subr.mxu0 0.0
    %136 = vmatpush1.msra.mxu0 0.0
    %137 = vmatprep.subr.mxu0 0.0
    %138 = vmatpush1.msra.mxu0 0.0
    %139 = vmatprep.subr.mxu0 0.0
    %140 = vmatpush1.msra.mxu0 0.0
    %141 = vmatprep.subr.mxu0 0.0
    %142 = vmatpush1.msra.mxu0 0.0
    %143 = vmatprep.subr.mxu0 0.0
    %144 = vmatpush1.msra.mxu0 0.0
    %145 = vmatprep.subr.mxu0 0.0
    %146 = vmatpush1.msra.mxu0 0.0
    %147 = vmatprep.subr.mxu0 0.0
    %148 = vmatpush1.msra.mxu0 0.0
    %149 = vmatprep.subr.mxu0 0.0
    %150 = vmatpush1.msra.mxu0 0.0
    %151 = vmatprep.subr.mxu0 0.0
    %152 = vmatpush1.msra.mxu0 0.0
    %153 = vmatprep.subr.mxu0 0.0
    %154 = vmatpush1.msra.mxu0 0.0
    %155 = vmatprep.subr.mxu0 0.0
    %156 = vmatpush1.msra.mxu0 0.0
    %157 = vmatprep.subr.mxu0 0.0
    %158 = vmatpush1.msra.mxu0 0.0
    %159 = vmatprep.subr.mxu0 0.0
    %160 = vmatpush1.msra.mxu0 0.0
    %161 = vmatprep.subr.mxu0 0.0
    %162 = vmatpush1.msra.mxu0 0.0
    %163 = vmatprep.subr.mxu0 0.0
    %164 = vmatpush1.msra.mxu0 0.0
    %165 = vmatprep.subr.mxu0 0.0
    %166 = vmatpush1.msra.mxu0 0.0
    %167 = vmatprep.subr.mxu0 0.0
    %168 = vmatpush1.msra.mxu0 0.0
    %169 = vmatprep.subr.mxu0 0.0
    %170 = vmatpush1.msra.mxu0 0.0
    %171 = vmatprep.subr.mxu0 0.0
    %172 = vmatpush1.msra.mxu0 0.0
    %173 = vmatprep.subr.mxu0 0.0
    %174 = vmatpush1.msra.mxu0 0.0
    %175 = vmatprep.mubr.f32.mxu0 0.0
    %176 = vmatmul.mubr.f32.gmra.mrb[0].mxu0 %v106
    %v177 = vpop.f32.mrb[0].mxu0
    %v178 = vadd.f32 %v103, %v177
    %v179 = vpop.f32.mrb[0].mxu0
    %180 = vmatprep.mubr.f32.mxu0 0.0
    %181 = vmatmul.mubr.f32.gmra.mrb[0].mxu0 %v109
    %v182 = vpop.f32.mrb[0].mxu0
    %v183 = vadd.f32 %v103, %v182
    %v184 = vpop.f32.mrb[0].mxu0
    %185 = vdwg.mxu0
    %s186 = scalar_lea.vmem [#allocation5], 64
    %v187 = vld [vmem:[%s186] sm:$0xff]
    %v188 = vld [vmem:[%s186 + $0x8] sm:$0xff]
    %v189 = vld [vmem:[%s186 + $0x10] sm:$0xff]
    %v190 = vld [vmem:[%s186 + $0x18] sm:$0xff]
    %v191 = vld [vmem:[#allocation7 + $0x2] sm:$0x1]
    %v192 = vlaneseq
    %v193 = vshrl.u32 %v192, 7
    %v194 = vsub.s32 0, %v193
    %v195 = vrot.slane %v191, %v194
    %196 = vmatprep.subr.mxu0 0.0
    %197 = vmatpush1.msra.mxu0 %v187
    %198 = vmatprep.subr.mxu0 0.0
    %199 = vmatpush1.msra.mxu0 %v188
    %200 = vmatprep.subr.mxu0 0.0
    %201 = vmatpush1.msra.mxu0 %v189
    %202 = vmatprep.subr.mxu0 0.0
    %203 = vmatpush1.msra.mxu0 %v190
    %204 = vmatprep.subr.mxu0 0.0
    %205 = vmatpush1.msra.mxu0 0.0
    %206 = vmatprep.subr.mxu0 0.0
    %207 = vmatpush1.msra.mxu0 0.0
    %208 = vmatprep.subr.mxu0 0.0
    %209 = vmatpush1.msra.mxu0 0.0
    %210 = vmatprep.subr.mxu0 0.0
    %211 = vmatpush1.msra.mxu0 0.0
    %212 = vmatprep.subr.mxu0 0.0
    %213 = vmatpush1.msra.mxu0 0.0
    %214 = vmatprep.subr.mxu0 0.0
    %215 = vmatpush1.msra.mxu0 0.0
    %216 = vmatprep.subr.mxu0 0.0
    %217 = vmatpush1.msra.mxu0 0.0
    %218 = vmatprep.subr.mxu0 0.0
    %219 = vmatpush1.msra.mxu0 0.0
    %220 = vmatprep.subr.mxu0 0.0
    %221 = vmatpush1.msra.mxu0 0.0
    %222 = vmatprep.subr.mxu0 0.0
    %223 = vmatpush1.msra.mxu0 0.0
    %224 = vmatprep.subr.mxu0 0.0
    %225 = vmatpush1.msra.mxu0 0.0
    %226 = vmatprep.subr.mxu0 0.0
    %227 = vmatpush1.msra.mxu0 0.0
    %228 = vmatprep.subr.mxu0 0.0
    %229 = vmatpush1.msra.mxu0 0.0
    %230 = vmatprep.subr.mxu0 0.0
    %231 = vmatpush1.msra.mxu0 0.0
    %232 = vmatprep.subr.mxu0 0.0
    %233 = vmatpush1.msra.mxu0 0.0
    %234 = vmatprep.subr.mxu0 0.0
    %235 = vmatpush1.msra.mxu0 0.0
    %236 = vmatprep.subr.mxu0 0.0
    %237 = vmatpush1.msra.mxu0 0.0
    %238 = vmatprep.subr.mxu0 0.0
    %239 = vmatpush1.msra.mxu0 0.0
    %240 = vmatprep.subr.mxu0 0.0
    %241 = vmatpush1.msra.mxu0 0.0
    %242 = vmatprep.subr.mxu0 0.0
    %243 = vmatpush1.msra.mxu0 0.0
    %244 = vmatprep.subr.mxu0 0.0
    %245 = vmatpush1.msra.mxu0 0.0
    %246 = vmatprep.subr.mxu0 0.0
    %247 = vmatpush1.msra.mxu0 0.0
    %248 = vmatprep.subr.mxu0 0.0
    %249 = vmatpush1.msra.mxu0 0.0
    %250 = vmatprep.subr.mxu0 0.0
    %251 = vmatpush1.msra.mxu0 0.0
    %252 = vmatprep.subr.mxu0 0.0
    %253 = vmatpush1.msra.mxu0 0.0
    %254 = vmatprep.subr.mxu0 0.0
    %255 = vmatpush1.msra.mxu0 0.0
    %256 = vmatprep.subr.mxu0 0.0
    %257 = vmatpush1.msra.mxu0 0.0
    %258 = vmatprep.subr.mxu0 0.0
    %259 = vmatpush1.msra.mxu0 0.0
    %260 = vmatprep.mubr.f32.mxu0 0.0
    %261 = vmatmul.mubr.f32.gmra.mrb[0].mxu0 %v106
    %v262 = vpop.f32.mrb[0].mxu0
    %v263 = vadd.f32 %v195, %v262
    %v264 = vpop.f32.mrb[0].mxu0
    %265 = vmatprep.mubr.f32.mxu0 0.0
    %266 = vmatmul.mubr.f32.gmra.mrb[0].mxu0 %v109
    %v267 = vpop.f32.mrb[0].mxu0
    %v268 = vadd.f32 %v195, %v267
    %v269 = vpop.f32.mrb[0].mxu0
    %270 = vdwg.mxu0
    %s271 = scalar_lea.vmem [#allocation5], 128
    %v272 = vld [vmem:[%s271] sm:$0xff]
    %v273 = vld [vmem:[%s271 + $0x8] sm:$0xff]
    %v274 = vld [vmem:[%s271 + $0x10] sm:$0xff]
    %v275 = vld [vmem:[%s271 + $0x18] sm:$0xff]
    %v276 = vld [vmem:[#allocation7 + $0x4] sm:$0x1]
    %v277 = vlaneseq
    %v278 = vshrl.u32 %v277, 7
    %v279 = vsub.s32 0, %v278
    %v280 = vrot.slane %v276, %v279
    %281 = vmatprep.subr.mxu0 0.0
    %282 = vmatpush1.msra.mxu0 %v272
    %283 = vmatprep.subr.mxu0 0.0
    %284 = vmatpush1.msra.mxu0 %v273
    %285 = vmatprep.subr.mxu0 0.0
    %286 = vmatpush1.msra.mxu0 %v274
    %287 = vmatprep.subr.mxu0 0.0
    %288 = vmatpush1.msra.mxu0 %v275
    %289 = vmatprep.subr.mxu0 0.0
    %290 = vmatpush1.msra.mxu0 0.0
    %291 = vmatprep.subr.mxu0 0.0
    %292 = vmatpush1.msra.mxu0 0.0
    %293 = vmatprep.subr.mxu0 0.0
    %294 = vmatpush1.msra.mxu0 0.0
    %295 = vmatprep.subr.mxu0 0.0
    %296 = vmatpush1.msra.mxu0 0.0
    %297 = vmatprep.subr.mxu0 0.0
    %298 = vmatpush1.msra.mxu0 0.0
    %299 = vmatprep.subr.mxu0 0.0
    %300 = vmatpush1.msra.mxu0 0.0
    %301 = vmatprep.subr.mxu0 0.0
    %302 = vmatpush1.msra.mxu0 0.0
    %303 = vmatprep.subr.mxu0 0.0
    %304 = vmatpush1.msra.mxu0 0.0
    %305 = vmatprep.subr.mxu0 0.0
    %306 = vmatpush1.msra.mxu0 0.0
    %307 = vmatprep.subr.mxu0 0.0
    %308 = vmatpush1.msra.mxu0 0.0
    %309 = vmatprep.subr.mxu0 0.0
    %310 = vmatpush1.msra.mxu0 0.0
    %311 = vmatprep.subr.mxu0 0.0
    %312 = vmatpush1.msra.mxu0 0.0
    %313 = vmatprep.subr.mxu0 0.0
    %314 = vmatpush1.msra.mxu0 0.0
    %315 = vmatprep.subr.mxu0 0.0
    %316 = vmatpush1.msra.mxu0 0.0
    %317 = vmatprep.subr.mxu0 0.0
    %318 = vmatpush1.msra.mxu0 0.0
    %319 = vmatprep.subr.mxu0 0.0
    %320 = vmatpush1.msra.mxu0 0.0
    %321 = vmatprep.subr.mxu0 0.0
    %322 = vmatpush1.msra.mxu0 0.0
    %323 = vmatprep.subr.mxu0 0.0
    %324 = vmatpush1.msra.mxu0 0.0
    %325 = vmatprep.subr.mxu0 0.0
    %326 = vmatpush1.msra.mxu0 0.0
    %327 = vmatprep.subr.mxu0 0.0
    %328 = vmatpush1.msra.mxu0 0.0
    %329 = vmatprep.subr.mxu0 0.0
    %330 = vmatpush1.msra.mxu0 0.0
    %331 = vmatprep.subr.mxu0 0.0
    %332 = vmatpush1.msra.mxu0 0.0
    %333 = vmatprep.subr.mxu0 0.0
    %334 = vmatpush1.msra.mxu0 0.0
    %335 = vmatprep.subr.mxu0 0.0
    %336 = vmatpush1.msra.mxu0 0.0
    %337 = vmatprep.subr.mxu0 0.0
    %338 = vmatpush1.msra.mxu0 0.0
    %339 = vmatprep.subr.mxu0 0.0
    %340 = vmatpush1.msra.mxu0 0.0
    %341 = vmatprep.subr.mxu0 0.0
    %342 = vmatpush1.msra.mxu0 0.0
    %343 = vmatprep.subr.mxu0 0.0
    %344 = vmatpush1.msra.mxu0 0.0
    %345 = vmatprep.mubr.f32.mxu0 0.0
    %346 = vmatmul.mubr.f32.gmra.mrb[0].mxu0 %v106
    %v347 = vpop.f32.mrb[0].mxu0
    %v348 = vadd.f32 %v280, %v347
    %v349 = vpop.f32.mrb[0].mxu0
    %350 = vmatprep.mubr.f32.mxu0 0.0
    %351 = vmatmul.mubr.f32.gmra.mrb[0].mxu0 %v109
    %v352 = vpop.f32.mrb[0].mxu0
    %v353 = vadd.f32 %v280, %v352
    %v354 = vpop.f32.mrb[0].mxu0
    %355 = vdwg.mxu0
    %v357 = vsel %vm104, %v178, 0
    %v360 = vsel %vm104, %v263, 0
    %362 = vmatprep.subr.mxu0 0.0
    %363 = vmatpush1.xpose.msra.mxu0 %v360
    %364 = vmatprep.subr.mxu0 0.0
    %365 = vmatpush1.xpose.msra.mxu0 0.0
    %366 = vmatprep.subr.mxu0 0.0
    %367 = vmatpush1.xpose.msra.mxu0 0.0
    %368 = vmatprep.subr.mxu0 0.0
    %369 = vmatpush1.xpose.msra.mxu0 0.0
    %370 = vmatprep.subr.mxu0 0.0
    %371 = vmatpush1.xpose.msra.mxu0 0.0
    %372 = vmatprep.subr.mxu0 0.0
    %373 = vmatpush1.xpose.msra.mxu0 0.0
    %374 = vmatprep.subr.mxu0 0.0
    %375 = vmatpush1.xpose.msra.mxu0 0.0
    %376 = vmatprep.subr.mxu0 0.0
    %377 = vmatpush1.xpose.msra.mxu0 0.0
    %378 = vmatprep.subr.mxu0 0.0
    %379 = vmatpush1.xpose.msra.mxu0 0.0
    %380 = vmatprep.subr.mxu0 0.0
    %381 = vmatpush1.xpose.msra.mxu0 0.0
    %382 = vmatprep.subr.mxu0 0.0
    %383 = vmatpush1.xpose.msra.mxu0 0.0
    %384 = vmatprep.subr.mxu0 0.0
    %385 = vmatpush1.xpose.msra.mxu0 0.0
    %386 = vmatprep.subr.mxu0 0.0
    %387 = vmatpush1.xpose.msra.mxu0 0.0
    %388 = vmatprep.subr.mxu0 0.0
    %389 = vmatpush1.xpose.msra.mxu0 0.0
    %390 = vmatprep.subr.mxu0 0.0
    %391 = vmatpush1.xpose.msra.mxu0 0.0
    %392 = vmatprep.subr.mxu0 0.0
    %393 = vmatpush1.xpose.msra.mxu0 0.0
    %394 = vmatprep.subr.mxu0 0.0
    %395 = vmatpush1.xpose.msra.mxu0 0.0
    %396 = vmatprep.subr.mxu0 0.0
    %397 = vmatpush1.xpose.msra.mxu0 0.0
    %398 = vmatprep.subr.mxu0 0.0
    %399 = vmatpush1.xpose.msra.mxu0 0.0
    %400 = vmatprep.subr.mxu0 0.0
    %401 = vmatpush1.xpose.msra.mxu0 0.0
    %402 = vmatprep.subr.mxu0 0.0
    %403 = vmatpush1.xpose.msra.mxu0 0.0
    %404 = vmatprep.subr.mxu0 0.0
    %405 = vmatpush1.xpose.msra.mxu0 0.0
    %406 = vmatprep.subr.mxu0 0.0
    %407 = vmatpush1.xpose.msra.mxu0 0.0
    %408 = vmatprep.subr.mxu0 0.0
    %409 = vmatpush1.xpose.msra.mxu0 0.0
    %410 = vmatprep.subr.mxu0 0.0
    %411 = vmatpush1.xpose.msra.mxu0 0.0
    %412 = vmatprep.subr.mxu0 0.0
    %413 = vmatpush1.xpose.msra.mxu0 0.0
    %414 = vmatprep.subr.mxu0 0.0
    %415 = vmatpush1.xpose.msra.mxu0 0.0
    %416 = vmatprep.subr.mxu0 0.0
    %417 = vmatpush1.xpose.msra.mxu0 0.0
    %418 = vmatprep.subr.mxu0 0.0
    %419 = vmatpush1.xpose.msra.mxu0 0.0
    %420 = vmatprep.subr.mxu0 0.0
    %421 = vmatpush1.xpose.msra.mxu0 0.0
    %422 = vmatprep.subr.mxu0 0.0
    %423 = vmatpush1.xpose.msra.mxu0 0.0
    %424 = vmatprep.subr.mxu0 0.0
    %425 = vmatpush1.xpose.msra.mxu0 0.0
    %426 = vmatprep.mubr.f32.mxu0 0.0
    %427 = vmatmul.mubr.f32.gmra.mrb[0].mxu0 %v357
    %v428 = vpop.f32.mrb[0].mxu0
    %v429 = vadd.f32 0.0, %v428
    %v430 = vpop.f32.mrb[0].mxu0
    %431 = vdwg.mxu0
    %v433 = vsel %vm104, %v183, 0
    %v436 = vsel %vm104, %v268, 0
    %438 = vmatprep.subr.mxu0 0.0
    %439 = vmatpush1.xpose.msra.mxu0 %v436
    %440 = vmatprep.subr.mxu0 0.0
    %441 = vmatpush1.xpose.msra.mxu0 0.0
    %442 = vmatprep.subr.mxu0 0.0
    %443 = vmatpush1.xpose.msra.mxu0 0.0
    %444 = vmatprep.subr.mxu0 0.0
    %445 = vmatpush1.xpose.msra.mxu0 0.0
    %446 = vmatprep.subr.mxu0 0.0
    %447 = vmatpush1.xpose.msra.mxu0 0.0
    %448 = vmatprep.subr.mxu0 0.0
    %449 = vmatpush1.xpose.msra.mxu0 0.0
    %450 = vmatprep.subr.mxu0 0.0
    %451 = vmatpush1.xpose.msra.mxu0 0.0
    %452 = vmatprep.subr.mxu0 0.0
    %453 = vmatpush1.xpose.msra.mxu0 0.0
    %454 = vmatprep.subr.mxu0 0.0
    %455 = vmatpush1.xpose.msra.mxu0 0.0
    %456 = vmatprep.subr.mxu0 0.0
    %457 = vmatpush1.xpose.msra.mxu0 0.0
    %458 = vmatprep.subr.mxu0 0.0
    %459 = vmatpush1.xpose.msra.mxu0 0.0
    %460 = vmatprep.subr.mxu0 0.0
    %461 = vmatpush1.xpose.msra.mxu0 0.0
    %462 = vmatprep.subr.mxu0 0.0
    %463 = vmatpush1.xpose.msra.mxu0 0.0
    %464 = vmatprep.subr.mxu0 0.0
    %465 = vmatpush1.xpose.msra.mxu0 0.0
    %466 = vmatprep.subr.mxu0 0.0
    %467 = vmatpush1.xpose.msra.mxu0 0.0
    %468 = vmatprep.subr.mxu0 0.0
    %469 = vmatpush1.xpose.msra.mxu0 0.0
    %470 = vmatprep.subr.mxu0 0.0
    %471 = vmatpush1.xpose.msra.mxu0 0.0
    %472 = vmatprep.subr.mxu0 0.0
    %473 = vmatpush1.xpose.msra.mxu0 0.0
    %474 = vmatprep.subr.mxu0 0.0
    %475 = vmatpush1.xpose.msra.mxu0 0.0
    %476 = vmatprep.subr.mxu0 0.0
    %477 = vmatpush1.xpose.msra.mxu0 0.0
    %478 = vmatprep.subr.mxu0 0.0
    %479 = vmatpush1.xpose.msra.mxu0 0.0
    %480 = vmatprep.subr.mxu0 0.0
    %481 = vmatpush1.xpose.msra.mxu0 0.0
    %482 = vmatprep.subr.mxu0 0.0
    %483 = vmatpush1.xpose.msra.mxu0 0.0
    %484 = vmatprep.subr.mxu0 0.0
    %485 = vmatpush1.xpose.msra.mxu0 0.0
    %486 = vmatprep.subr.mxu0 0.0
    %487 = vmatpush1.xpose.msra.mxu0 0.0
    %488 = vmatprep.subr.mxu0 0.0
    %489 = vmatpush1.xpose.msra.mxu0 0.0
    %490 = vmatprep.subr.mxu0 0.0
    %491 = vmatpush1.xpose.msra.mxu0 0.0
    %492 = vmatprep.subr.mxu0 0.0
    %493 = vmatpush1.xpose.msra.mxu0 0.0
    %494 = vmatprep.subr.mxu0 0.0
    %495 = vmatpush1.xpose.msra.mxu0 0.0
    %496 = vmatprep.subr.mxu0 0.0
    %497 = vmatpush1.xpose.msra.mxu0 0.0
    %498 = vmatprep.subr.mxu0 0.0
    %499 = vmatpush1.xpose.msra.mxu0 0.0
    %500 = vmatprep.subr.mxu0 0.0
    %501 = vmatpush1.xpose.msra.mxu0 0.0
    %502 = vmatprep.mubr.f32.mxu0 0.0
    %503 = vmatmul.mubr.f32.gmra.mrb[0].mxu0 %v433
    %v504 = vpop.f32.mrb[0].mxu0
    %v505 = vadd.f32 0.0, %v504
    %v506 = vpop.f32.mrb[0].mxu0
    %507 = vdwg.mxu0
    %v508 = vmul.f32 %v429, 0.25
    %v509 = vmul.f32 %v505, 0.25
    %v510 = vsel %vm65, 1, 0
    %vm511 = vcmp.eq.s32.totalorder %v510, 1
    %v512 = vsel %vm511, %v508, -10000.0
    %v513 = vsel %vm511, %v509, -10000.0
    %v516 = vlaneseq
    %v517 = vshrl.u32 %v516, 7
    %v518 = vsub.s32 0, %v517
    %v519 = vrot.slane %v93, %v518
    %v520 = vlaneseq
    %v521 = vshrl.u32 %v520, 7
    %v522 = vsub.s32 0, %v521
    %v523 = vrot.slane %v94, %v522
    %v526 = vadd.f32 %v512, %v519
    %v527 = vadd.f32 %v513, %v523
    %vm528 = vcmask 64512
    %v529 = vsel %vm528, %v526, -inf
    %530 = vmax.xlane.f32.xlu0 %v529
    %v531 = vpop.xlane.xlu0 %530
    %v532 = vsel %vm528, %v527, -inf
    %533 = vmax.xlane.f32.xlu0 %v532
    %v534 = vpop.xlane.xlu0 %533
    %v535 = vsub.f32 %v526, %v531
    %v536 = vsub.f32 %v527, %v534
    %v537 = vmul.f32 %v535, 1.442695
    %v538 = vpow.pop %v537
    %v539 = vmul.f32 %v536, 1.442695
    %v540 = vpow.pop %v539
    %v541 = vsel %vm528, %v538, 0.0
    %542 = vadd.xlane.f32.xlu0 %v541
    %v543 = vpop.xlane.xlu0 %542
    %v544 = vsel %vm528, %v540, 0.0
    %545 = vadd.xlane.f32.xlu0 %v544
    %v546 = vpop.xlane.xlu0 %545
    %v547 = vrcp.pop %v543
    %v548 = vmul.f32 %v538, %v547
    %v549 = vrcp.pop %v546
    %v550 = vmul.f32 %v540, %v549
    %v552 = vsel %vm528, %v548, 0
    %554 = vmatprep.subr.mxu0 0.0
    %555 = vmatpush1.msra.mxu0 %v348
    %556 = vmatprep.subr.mxu0 0.0
    %557 = vmatpush1.msra.mxu0 0.0
    %558 = vmatprep.subr.mxu0 0.0
    %559 = vmatpush1.msra.mxu0 0.0
    %560 = vmatprep.subr.mxu0 0.0
    %561 = vmatpush1.msra.mxu0 0.0
    %562 = vmatprep.subr.mxu0 0.0
    %563 = vmatpush1.msra.mxu0 0.0
    %564 = vmatprep.subr.mxu0 0.0
    %565 = vmatpush1.msra.mxu0 0.0
    %566 = vmatprep.subr.mxu0 0.0
    %567 = vmatpush1.msra.mxu0 0.0
    %568 = vmatprep.subr.mxu0 0.0
    %569 = vmatpush1.msra.mxu0 0.0
    %570 = vmatprep.subr.mxu0 0.0
    %571 = vmatpush1.msra.mxu0 0.0
    %572 = vmatprep.subr.mxu0 0.0
    %573 = vmatpush1.msra.mxu0 0.0
    %574 = vmatprep.subr.mxu0 0.0
    %575 = vmatpush1.msra.mxu0 0.0
    %576 = vmatprep.subr.mxu0 0.0
    %577 = vmatpush1.msra.mxu0 0.0
    %578 = vmatprep.subr.mxu0 0.0
    %579 = vmatpush1.msra.mxu0 0.0
    %580 = vmatprep.subr.mxu0 0.0
    %581 = vmatpush1.msra.mxu0 0.0
    %582 = vmatprep.subr.mxu0 0.0
    %583 = vmatpush1.msra.mxu0 0.0
    %584 = vmatprep.subr.mxu0 0.0
    %585 = vmatpush1.msra.mxu0 0.0
    %586 = vmatprep.subr.mxu0 0.0
    %587 = vmatpush1.msra.mxu0 0.0
    %588 = vmatprep.subr.mxu0 0.0
    %589 = vmatpush1.msra.mxu0 0.0
    %590 = vmatprep.subr.mxu0 0.0
    %591 = vmatpush1.msra.mxu0 0.0
    %592 = vmatprep.subr.mxu0 0.0
    %593 = vmatpush1.msra.mxu0 0.0
    %594 = vmatprep.subr.mxu0 0.0
    %595 = vmatpush1.msra.mxu0 0.0
    %596 = vmatprep.subr.mxu0 0.0
    %597 = vmatpush1.msra.mxu0 0.0
    %598 = vmatprep.subr.mxu0 0.0
    %599 = vmatpush1.msra.mxu0 0.0
    %600 = vmatprep.subr.mxu0 0.0
    %601 = vmatpush1.msra.mxu0 0.0
    %602 = vmatprep.subr.mxu0 0.0
    %603 = vmatpush1.msra.mxu0 0.0
    %604 = vmatprep.subr.mxu0 0.0
    %605 = vmatpush1.msra.mxu0 0.0
    %606 = vmatprep.subr.mxu0 0.0
    %607 = vmatpush1.msra.mxu0 0.0
    %608 = vmatprep.subr.mxu0 0.0
    %609 = vmatpush1.msra.mxu0 0.0
    %610 = vmatprep.subr.mxu0 0.0
    %611 = vmatpush1.msra.mxu0 0.0
    %612 = vmatprep.subr.mxu0 0.0
    %613 = vmatpush1.msra.mxu0 0.0
    %614 = vmatprep.subr.mxu0 0.0
    %615 = vmatpush1.msra.mxu0 0.0
    %616 = vmatprep.subr.mxu0 0.0
    %617 = vmatpush1.msra.mxu0 0.0
    %618 = vmatprep.mubr.f32.mxu0 0.0
    %619 = vmatmul.mubr.f32.gmra.mrb[0].mxu0 %v552
    %v620 = vpop.f32.mrb[0].mxu0
    %v621 = vadd.f32 0.0, %v620
    %v622 = vpop.f32.mrb[0].mxu0
    %623 = vdwg.mxu0
    %v625 = vsel %vm528, %v550, 0
    %627 = vmatprep.subr.mxu0 0.0
    %628 = vmatpush1.msra.mxu0 %v353
    %629 = vmatprep.subr.mxu0 0.0
    %630 = vmatpush1.msra.mxu0 0.0
    %631 = vmatprep.subr.mxu0 0.0
    %632 = vmatpush1.msra.mxu0 0.0
    %633 = vmatprep.subr.mxu0 0.0
    %634 = vmatpush1.msra.mxu0 0.0
    %635 = vmatprep.subr.mxu0 0.0
    %636 = vmatpush1.msra.mxu0 0.0
    %637 = vmatprep.subr.mxu0 0.0
    %638 = vmatpush1.msra.mxu0 0.0
    %639 = vmatprep.subr.mxu0 0.0
    %640 = vmatpush1.msra.mxu0 0.0
    %641 = vmatprep.subr.mxu0 0.0
    %642 = vmatpush1.msra.mxu0 0.0
    %643 = vmatprep.subr.mxu0 0.0
    %644 = vmatpush1.msra.mxu0 0.0
    %645 = vmatprep.subr.mxu0 0.0
    %646 = vmatpush1.msra.mxu0 0.0
    %647 = vmatprep.subr.mxu0 0.0
    %648 = vmatpush1.msra.mxu0 0.0
    %649 = vmatprep.subr.mxu0 0.0
    %650 = vmatpush1.msra.mxu0 0.0
    %651 = vmatprep.subr.mxu0 0.0
    %652 = vmatpush1.msra.mxu0 0.0
    %653 = vmatprep.subr.mxu0 0.0
    %654 = vmatpush1.msra.mxu0 0.0
    %655 = vmatprep.subr.mxu0 0.0
    %656 = vmatpush1.msra.mxu0 0.0
    %657 = vmatprep.subr.mxu0 0.0
    %658 = vmatpush1.msra.mxu0 0.0
    %659 = vmatprep.subr.mxu0 0.0
    %660 = vmatpush1.msra.mxu0 0.0
    %661 = vmatprep.subr.mxu0 0.0
    %662 = vmatpush1.msra.mxu0 0.0
    %663 = vmatprep.subr.mxu0 0.0
    %664 = vmatpush1.msra.mxu0 0.0
    %665 = vmatprep.subr.mxu0 0.0
    %666 = vmatpush1.msra.mxu0 0.0
    %667 = vmatprep.subr.mxu0 0.0
    %668 = vmatpush1.msra.mxu0 0.0
    %669 = vmatprep.subr.mxu0 0.0
    %670 = vmatpush1.msra.mxu0 0.0
    %671 = vmatprep.subr.mxu0 0.0
    %672 = vmatpush1.msra.mxu0 0.0
    %673 = vmatprep.subr.mxu0 0.0
    %674 = vmatpush1.msra.mxu0 0.0
    %675 = vmatprep.subr.mxu0 0.0
    %676 = vmatpush1.msra.mxu0 0.0
    %677 = vmatprep.subr.mxu0 0.0
    %678 = vmatpush1.msra.mxu0 0.0
    %679 = vmatprep.subr.mxu0 0.0
    %680 = vmatpush1.msra.mxu0 0.0
    %681 = vmatprep.subr.mxu0 0.0
    %682 = vmatpush1.msra.mxu0 0.0
    %683 = vmatprep.subr.mxu0 0.0
    %684 = vmatpush1.msra.mxu0 0.0
    %685 = vmatprep.subr.mxu0 0.0
    %686 = vmatpush1.msra.mxu0 0.0
    %687 = vmatprep.subr.mxu0 0.0
    %688 = vmatpush1.msra.mxu0 0.0
    %689 = vmatprep.subr.mxu0 0.0
    %690 = vmatpush1.msra.mxu0 0.0
    %691 = vmatprep.mubr.f32.mxu0 0.0
    %692 = vmatmul.mubr.f32.gmra.mrb[0].mxu0 %v625
    %v693 = vpop.f32.mrb[0].mxu0
    %v694 = vadd.f32 0.0, %v693
    %v695 = vpop.f32.mrb[0].mxu0
    %696 = vdwg.mxu0
    %s697 = scalar_lea.vmem [#allocation5], 192
    %v698 = vld [vmem:[%s697] sm:$0xff]
    %v699 = vld [vmem:[%s697 + $0x8] sm:$0xff]
    %v700 = vld [vmem:[%s697 + $0x10] sm:$0xff]
    %v701 = vld [vmem:[%s697 + $0x18] sm:$0xff]
    %s702 = scalar_lea.vmem [#allocation5], 32
    %v703 = vld [vmem:[%s702] sm:$0xff]
    %v704 = vld [vmem:[%s702 + $0x8] sm:$0xff]
    %v705 = vld [vmem:[%s702 + $0x10] sm:$0xff]
    %v706 = vld [vmem:[%s702 + $0x18] sm:$0xff]
    %v707 = vld [vmem:[#allocation7 + $0x1] sm:$0x1]
    %v708 = vlaneseq
    %v709 = vshrl.u32 %v708, 7
    %v710 = vsub.s32 0, %v709
    %v711 = vrot.slane %v707, %v710
    %712 = vmatprep.subr.mxu0 0.0
    %713 = vmatpush1.msra.mxu0 %v703
    %714 = vmatprep.subr.mxu0 0.0
    %715 = vmatpush1.msra.mxu0 %v704
    %716 = vmatprep.subr.mxu0 0.0
    %717 = vmatpush1.msra.mxu0 %v705
    %718 = vmatprep.subr.mxu0 0.0
    %719 = vmatpush1.msra.mxu0 %v706
    %720 = vmatprep.subr.mxu0 0.0
    %721 = vmatpush1.msra.mxu0 0.0
    %722 = vmatprep.subr.mxu0 0.0
    %723 = vmatpush1.msra.mxu0 0.0
    %724 = vmatprep.subr.mxu0 0.0
    %725 = vmatpush1.msra.mxu0 0.0
    %726 = vmatprep.subr.mxu0 0.0
    %727 = vmatpush1.msra.mxu0 0.0
    %728 = vmatprep.subr.mxu0 0.0
    %729 = vmatpush1.msra.mxu0 0.0
    %730 = vmatprep.subr.mxu0 0.0
    %731 = vmatpush1.msra.mxu0 0.0
    %732 = vmatprep.subr.mxu0 0.0
    %733 = vmatpush1.msra.mxu0 0.0
    %734 = vmatprep.subr.mxu0 0.0
    %735 = vmatpush1.msra.mxu0 0.0
    %736 = vmatprep.subr.mxu0 0.0
    %737 = vmatpush1.msra.mxu0 0.0
    %738 = vmatprep.subr.mxu0 0.0
    %739 = vmatpush1.msra.mxu0 0.0
    %740 = vmatprep.subr.mxu0 0.0
    %741 = vmatpush1.msra.mxu0 0.0
    %742 = vmatprep.subr.mxu0 0.0
    %743 = vmatpush1.msra.mxu0 0.0
    %744 = vmatprep.subr.mxu0 0.0
    %745 = vmatpush1.msra.mxu0 0.0
    %746 = vmatprep.subr.mxu0 0.0
    %747 = vmatpush1.msra.mxu0 0.0
    %748 = vmatprep.subr.mxu0 0.0
    %749 = vmatpush1.msra.mxu0 0.0
    %750 = vmatprep.subr.mxu0 0.0
    %751 = vmatpush1.msra.mxu0 0.0
    %752 = vmatprep.subr.mxu0 0.0
    %753 = vmatpush1.msra.mxu0 0.0
    %754 = vmatprep.subr.mxu0 0.0
    %755 = vmatpush1.msra.mxu0 0.0
    %756 = vmatprep.subr.mxu0 0.0
    %757 = vmatpush1.msra.mxu0 0.0
    %758 = vmatprep.subr.mxu0 0.0
    %759 = vmatpush1.msra.mxu0 0.0
    %760 = vmatprep.subr.mxu0 0.0
    %761 = vmatpush1.msra.mxu0 0.0
    %762 = vmatprep.subr.mxu0 0.0
    %763 = vmatpush1.msra.mxu0 0.0
    %764 = vmatprep.subr.mxu0 0.0
    %765 = vmatpush1.msra.mxu0 0.0
    %766 = vmatprep.subr.mxu0 0.0
    %767 = vmatpush1.msra.mxu0 0.0
    %768 = vmatprep.subr.mxu0 0.0
    %769 = vmatpush1.msra.mxu0 0.0
    %770 = vmatprep.subr.mxu0 0.0
    %771 = vmatpush1.msra.mxu0 0.0
    %772 = vmatprep.subr.mxu0 0.0
    %773 = vmatpush1.msra.mxu0 0.0
    %774 = vmatprep.subr.mxu0 0.0
    %775 = vmatpush1.msra.mxu0 0.0
    %776 = vmatprep.mubr.f32.mxu0 0.0
    %777 = vmatmul.mubr.f32.gmra.mrb[0].mxu0 %v106
    %v778 = vpop.f32.mrb[0].mxu0
    %v779 = vadd.f32 %v711, %v778
    %v780 = vpop.f32.mrb[0].mxu0
    %781 = vmatprep.mubr.f32.mxu0 0.0
    %782 = vmatmul.mubr.f32.gmra.mrb[0].mxu0 %v109
    %v783 = vpop.f32.mrb[0].mxu0
    %v784 = vadd.f32 %v711, %v783
    %v785 = vpop.f32.mrb[0].mxu0
    %786 = vdwg.mxu0
    %s787 = scalar_lea.vmem [#allocation5], 96
    %v788 = vld [vmem:[%s787] sm:$0xff]
    %v789 = vld [vmem:[%s787 + $0x8] sm:$0xff]
    %v790 = vld [vmem:[%s787 + $0x10] sm:$0xff]
    %v791 = vld [vmem:[%s787 + $0x18] sm:$0xff]
    %v792 = vld [vmem:[#allocation7 + $0x3] sm:$0x1]
    %v793 = vlaneseq
    %v794 = vshrl.u32 %v793, 7
    %v795 = vsub.s32 0, %v794
    %v796 = vrot.slane %v792, %v795
    %797 = vmatprep.subr.mxu0 0.0
    %798 = vmatpush1.msra.mxu0 %v788
    %799 = vmatprep.subr.mxu0 0.0
    %800 = vmatpush1.msra.mxu0 %v789
    %801 = vmatprep.subr.mxu0 0.0
    %802 = vmatpush1.msra.mxu0 %v790
    %803 = vmatprep.subr.mxu0 0.0
    %804 = vmatpush1.msra.mxu0 %v791
    %805 = vmatprep.subr.mxu0 0.0
    %806 = vmatpush1.msra.mxu0 0.0
    %807 = vmatprep.subr.mxu0 0.0
    %808 = vmatpush1.msra.mxu0 0.0
    %809 = vmatprep.subr.mxu0 0.0
    %810 = vmatpush1.msra.mxu0 0.0
    %811 = vmatprep.subr.mxu0 0.0
    %812 = vmatpush1.msra.mxu0 0.0
    %813 = vmatprep.subr.mxu0 0.0
    %814 = vmatpush1.msra.mxu0 0.0
    %815 = vmatprep.subr.mxu0 0.0
    %816 = vmatpush1.msra.mxu0 0.0
    %817 = vmatprep.subr.mxu0 0.0
    %818 = vmatpush1.msra.mxu0 0.0
    %819 = vmatprep.subr.mxu0 0.0
    %820 = vmatpush1.msra.mxu0 0.0
    %821 = vmatprep.subr.mxu0 0.0
    %822 = vmatpush1.msra.mxu0 0.0
    %823 = vmatprep.subr.mxu0 0.0
    %824 = vmatpush1.msra.mxu0 0.0
    %825 = vmatprep.subr.mxu0 0.0
    %826 = vmatpush1.msra.mxu0 0.0
    %827 = vmatprep.subr.mxu0 0.0
    %828 = vmatpush1.msra.mxu0 0.0
    %829 = vmatprep.subr.mxu0 0.0
    %830 = vmatpush1.msra.mxu0 0.0
    %831 = vmatprep.subr.mxu0 0.0
    %832 = vmatpush1.msra.mxu0 0.0
    %833 = vmatprep.subr.mxu0 0.0
    %834 = vmatpush1.msra.mxu0 0.0
    %835 = vmatprep.subr.mxu0 0.0
    %836 = vmatpush1.msra.mxu0 0.0
    %837 = vmatprep.subr.mxu0 0.0
    %838 = vmatpush1.msra.mxu0 0.0
    %839 = vmatprep.subr.mxu0 0.0
    %840 = vmatpush1.msra.mxu0 0.0
    %841 = vmatprep.subr.mxu0 0.0
    %842 = vmatpush1.msra.mxu0 0.0
    %843 = vmatprep.subr.mxu0 0.0
    %844 = vmatpush1.msra.mxu0 0.0
    %845 = vmatprep.subr.mxu0 0.0
    %846 = vmatpush1.msra.mxu0 0.0
    %847 = vmatprep.subr.mxu0 0.0
    %848 = vmatpush1.msra.mxu0 0.0
    %849 = vmatprep.subr.mxu0 0.0
    %850 = vmatpush1.msra.mxu0 0.0
    %851 = vmatprep.subr.mxu0 0.0
    %852 = vmatpush1.msra.mxu0 0.0
    %853 = vmatprep.subr.mxu0 0.0
    %854 = vmatpush1.msra.mxu0 0.0
    %855 = vmatprep.subr.mxu0 0.0
    %856 = vmatpush1.msra.mxu0 0.0
    %857 = vmatprep.subr.mxu0 0.0
    %858 = vmatpush1.msra.mxu0 0.0
    %859 = vmatprep.subr.mxu0 0.0
    %860 = vmatpush1.msra.mxu0 0.0
    %861 = vmatprep.mubr.f32.mxu0 0.0
    %862 = vmatmul.mubr.f32.gmra.mrb[0].mxu0 %v106
    %v863 = vpop.f32.mrb[0].mxu0
    %v864 = vadd.f32 %v796, %v863
    %v865 = vpop.f32.mrb[0].mxu0
    %866 = vmatprep.mubr.f32.mxu0 0.0
    %867 = vmatmul.mubr.f32.gmra.mrb[0].mxu0 %v109
    %v868 = vpop.f32.mrb[0].mxu0
    %v869 = vadd.f32 %v796, %v868
    %v870 = vpop.f32.mrb[0].mxu0
    %871 = vdwg.mxu0
    %s872 = scalar_lea.vmem [#allocation5], 160
    %v873 = vld [vmem:[%s872] sm:$0xff]
    %v874 = vld [vmem:[%s872 + $0x8] sm:$0xff]
    %v875 = vld [vmem:[%s872 + $0x10] sm:$0xff]
    %v876 = vld [vmem:[%s872 + $0x18] sm:$0xff]
    %v877 = vld [vmem:[#allocation7 + $0x5] sm:$0x1]
    %v878 = vlaneseq
    %v879 = vshrl.u32 %v878, 7
    %v880 = vsub.s32 0, %v879
    %v881 = vrot.slane %v877, %v880
    %882 = vmatprep.subr.mxu0 0.0
    %883 = vmatpush1.msra.mxu0 %v873
    %884 = vmatprep.subr.mxu0 0.0
    %885 = vmatpush1.msra.mxu0 %v874
    %886 = vmatprep.subr.mxu0 0.0
    %887 = vmatpush1.msra.mxu0 %v875
    %888 = vmatprep.subr.mxu0 0.0
    %889 = vmatpush1.msra.mxu0 %v876
    %890 = vmatprep.subr.mxu0 0.0
    %891 = vmatpush1.msra.mxu0 0.0
    %892 = vmatprep.subr.mxu0 0.0
    %893 = vmatpush1.msra.mxu0 0.0
    %894 = vmatprep.subr.mxu0 0.0
    %895 = vmatpush1.msra.mxu0 0.0
    %896 = vmatprep.subr.mxu0 0.0
    %897 = vmatpush1.msra.mxu0 0.0
    %898 = vmatprep.subr.mxu0 0.0
    %899 = vmatpush1.msra.mxu0 0.0
    %900 = vmatprep.subr.mxu0 0.0
    %901 = vmatpush1.msra.mxu0 0.0
    %902 = vmatprep.subr.mxu0 0.0
    %903 = vmatpush1.msra.mxu0 0.0
    %904 = vmatprep.subr.mxu0 0.0
    %905 = vmatpush1.msra.mxu0 0.0
    %906 = vmatprep.subr.mxu0 0.0
    %907 = vmatpush1.msra.mxu0 0.0
    %908 = vmatprep.subr.mxu0 0.0
    %909 = vmatpush1.msra.mxu0 0.0
    %910 = vmatprep.subr.mxu0 0.0
    %911 = vmatpush1.msra.mxu0 0.0
    %912 = vmatprep.subr.mxu0 0.0
    %913 = vmatpush1.msra.mxu0 0.0
    %914 = vmatprep.subr.mxu0 0.0
    %915 = vmatpush1.msra.mxu0 0.0
    %916 = vmatprep.subr.mxu0 0.0
    %917 = vmatpush1.msra.mxu0 0.0
    %918 = vmatprep.subr.mxu0 0.0
    %919 = vmatpush1.msra.mxu0 0.0
    %920 = vmatprep.subr.mxu0 0.0
    %921 = vmatpush1.msra.mxu0 0.0
    %922 = vmatprep.subr.mxu0 0.0
    %923 = vmatpush1.msra.mxu0 0.0
    %924 = vmatprep.subr.mxu0 0.0
    %925 = vmatpush1.msra.mxu0 0.0
    %926 = vmatprep.subr.mxu0 0.0
    %927 = vmatpush1.msra.mxu0 0.0
    %928 = vmatprep.subr.mxu0 0.0
    %929 = vmatpush1.msra.mxu0 0.0
    %930 = vmatprep.subr.mxu0 0.0
    %931 = vmatpush1.msra.mxu0 0.0
    %932 = vmatprep.subr.mxu0 0.0
    %933 = vmatpush1.msra.mxu0 0.0
    %934 = vmatprep.subr.mxu0 0.0
    %935 = vmatpush1.msra.mxu0 0.0
    %936 = vmatprep.subr.mxu0 0.0
    %937 = vmatpush1.msra.mxu0 0.0
    %938 = vmatprep.subr.mxu0 0.0
    %939 = vmatpush1.msra.mxu0 0.0
    %940 = vmatprep.subr.mxu0 0.0
    %941 = vmatpush1.msra.mxu0 0.0
    %942 = vmatprep.subr.mxu0 0.0
    %943 = vmatpush1.msra.mxu0 0.0
    %944 = vmatprep.subr.mxu0 0.0
    %945 = vmatpush1.msra.mxu0 0.0
    %946 = vmatprep.mubr.f32.mxu0 0.0
    %947 = vmatmul.mubr.f32.gmra.mrb[0].mxu0 %v106
    %v948 = vpop.f32.mrb[0].mxu0
    %v949 = vadd.f32 %v881, %v948
    %v950 = vpop.f32.mrb[0].mxu0
    %951 = vmatprep.mubr.f32.mxu0 0.0
    %952 = vmatmul.mubr.f32.gmra.mrb[0].mxu0 %v109
    %v953 = vpop.f32.mrb[0].mxu0
    %v954 = vadd.f32 %v881, %v953
    %v955 = vpop.f32.mrb[0].mxu0
    %956 = vdwg.mxu0
    %v958 = vsel %vm104, %v779, 0
    %v961 = vsel %vm104, %v864, 0
    %963 = vmatprep.subr.mxu0 0.0
    %964 = vmatpush1.xpose.msra.mxu0 %v961
    %965 = vmatprep.subr.mxu0 0.0
    %966 = vmatpush1.xpose.msra.mxu0 0.0
    %967 = vmatprep.subr.mxu0 0.0
    %968 = vmatpush1.xpose.msra.mxu0 0.0
    %969 = vmatprep.subr.mxu0 0.0
    %970 = vmatpush1.xpose.msra.mxu0 0.0
    %971 = vmatprep.subr.mxu0 0.0
    %972 = vmatpush1.xpose.msra.mxu0 0.0
    %973 = vmatprep.subr.mxu0 0.0
    %974 = vmatpush1.xpose.msra.mxu0 0.0
    %975 = vmatprep.subr.mxu0 0.0
    %976 = vmatpush1.xpose.msra.mxu0 0.0
    %977 = vmatprep.subr.mxu0 0.0
    %978 = vmatpush1.xpose.msra.mxu0 0.0
    %979 = vmatprep.subr.mxu0 0.0
    %980 = vmatpush1.xpose.msra.mxu0 0.0
    %981 = vmatprep.subr.mxu0 0.0
    %982 = vmatpush1.xpose.msra.mxu0 0.0
    %983 = vmatprep.subr.mxu0 0.0
    %984 = vmatpush1.xpose.msra.mxu0 0.0
    %985 = vmatprep.subr.mxu0 0.0
    %986 = vmatpush1.xpose.msra.mxu0 0.0
    %987 = vmatprep.subr.mxu0 0.0
    %988 = vmatpush1.xpose.msra.mxu0 0.0
    %989 = vmatprep.subr.mxu0 0.0
    %990 = vmatpush1.xpose.msra.mxu0 0.0
    %991 = vmatprep.subr.mxu0 0.0
    %992 = vmatpush1.xpose.msra.mxu0 0.0
    %993 = vmatprep.subr.mxu0 0.0
    %994 = vmatpush1.xpose.msra.mxu0 0.0
    %995 = vmatprep.subr.mxu0 0.0
    %996 = vmatpush1.xpose.msra.mxu0 0.0
    %997 = vmatprep.subr.mxu0 0.0
    %998 = vmatpush1.xpose.msra.mxu0 0.0
    %999 = vmatprep.subr.mxu0 0.0
    %1000 = vmatpush1.xpose.msra.mxu0 0.0
    %1001 = vmatprep.subr.mxu0 0.0
    %1002 = vmatpush1.xpose.msra.mxu0 0.0
    %1003 = vmatprep.subr.mxu0 0.0
    %1004 = vmatpush1.xpose.msra.mxu0 0.0
    %1005 = vmatprep.subr.mxu0 0.0
    %1006 = vmatpush1.xpose.msra.mxu0 0.0
    %1007 = vmatprep.subr.mxu0 0.0
    %1008 = vmatpush1.xpose.msra.mxu0 0.0
    %1009 = vmatprep.subr.mxu0 0.0
    %1010 = vmatpush1.xpose.msra.mxu0 0.0
    %1011 = vmatprep.subr.mxu0 0.0
    %1012 = vmatpush1.xpose.msra.mxu0 0.0
    %1013 = vmatprep.subr.mxu0 0.0
    %1014 = vmatpush1.xpose.msra.mxu0 0.0
    %1015 = vmatprep.subr.mxu0 0.0
    %1016 = vmatpush1.xpose.msra.mxu0 0.0
    %1017 = vmatprep.subr.mxu0 0.0
    %1018 = vmatpush1.xpose.msra.mxu0 0.0
    %1019 = vmatprep.subr.mxu0 0.0
    %1020 = vmatpush1.xpose.msra.mxu0 0.0
    %1021 = vmatprep.subr.mxu0 0.0
    %1022 = vmatpush1.xpose.msra.mxu0 0.0
    %1023 = vmatprep.subr.mxu0 0.0
    %1024 = vmatpush1.xpose.msra.mxu0 0.0
    %1025 = vmatprep.subr.mxu0 0.0
    %1026 = vmatpush1.xpose.msra.mxu0 0.0
    %1027 = vmatprep.mubr.f32.mxu0 0.0
    %1028 = vmatmul.mubr.f32.gmra.mrb[0].mxu0 %v958
    %v1029 = vpop.f32.mrb[0].mxu0
    %v1030 = vadd.f32 0.0, %v1029
    %v1031 = vpop.f32.mrb[0].mxu0
    %1032 = vdwg.mxu0
    %v1034 = vsel %vm104, %v784, 0
    %v1037 = vsel %vm104, %v869, 0
    %1039 = vmatprep.subr.mxu0 0.0
    %1040 = vmatpush1.xpose.msra.mxu0 %v1037
    %1041 = vmatprep.subr.mxu0 0.0
    %1042 = vmatpush1.xpose.msra.mxu0 0.0
    %1043 = vmatprep.subr.mxu0 0.0
    %1044 = vmatpush1.xpose.msra.mxu0 0.0
    %1045 = vmatprep.subr.mxu0 0.0
    %1046 = vmatpush1.xpose.msra.mxu0 0.0
    %1047 = vmatprep.subr.mxu0 0.0
    %1048 = vmatpush1.xpose.msra.mxu0 0.0
    %1049 = vmatprep.subr.mxu0 0.0
    %1050 = vmatpush1.xpose.msra.mxu0 0.0
    %1051 = vmatprep.subr.mxu0 0.0
    %1052 = vmatpush1.xpose.msra.mxu0 0.0
    %1053 = vmatprep.subr.mxu0 0.0
    %1054 = vmatpush1.xpose.msra.mxu0 0.0
    %1055 = vmatprep.subr.mxu0 0.0
    %1056 = vmatpush1.xpose.msra.mxu0 0.0
    %1057 = vmatprep.subr.mxu0 0.0
    %1058 = vmatpush1.xpose.msra.mxu0 0.0
    %1059 = vmatprep.subr.mxu0 0.0
    %1060 = vmatpush1.xpose.msra.mxu0 0.0
    %1061 = vmatprep.subr.mxu0 0.0
    %1062 = vmatpush1.xpose.msra.mxu0 0.0
    %1063 = vmatprep.subr.mxu0 0.0
    %1064 = vmatpush1.xpose.msra.mxu0 0.0
    %1065 = vmatprep.subr.mxu0 0.0
    %1066 = vmatpush1.xpose.msra.mxu0 0.0
    %1067 = vmatprep.subr.mxu0 0.0
    %1068 = vmatpush1.xpose.msra.mxu0 0.0
    %1069 = vmatprep.subr.mxu0 0.0
    %1070 = vmatpush1.xpose.msra.mxu0 0.0
    %1071 = vmatprep.subr.mxu0 0.0
    %1072 = vmatpush1.xpose.msra.mxu0 0.0
    %1073 = vmatprep.subr.mxu0 0.0
    %1074 = vmatpush1.xpose.msra.mxu0 0.0
    %1075 = vmatprep.subr.mxu0 0.0
    %1076 = vmatpush1.xpose.msra.mxu0 0.0
    %1077 = vmatprep.subr.mxu0 0.0
    %1078 = vmatpush1.xpose.msra.mxu0 0.0
    %1079 = vmatprep.subr.mxu0 0.0
    %1080 = vmatpush1.xpose.msra.mxu0 0.0
    %1081 = vmatprep.subr.mxu0 0.0
    %1082 = vmatpush1.xpose.msra.mxu0 0.0
    %1083 = vmatprep.subr.mxu0 0.0
    %1084 = vmatpush1.xpose.msra.mxu0 0.0
    %1085 = vmatprep.subr.mxu0 0.0
    %1086 = vmatpush1.xpose.msra.mxu0 0.0
    %1087 = vmatprep.subr.mxu0 0.0
    %1088 = vmatpush1.xpose.msra.mxu0 0.0
    %1089 = vmatprep.subr.mxu0 0.0
    %1090 = vmatpush1.xpose.msra.mxu0 0.0
    %1091 = vmatprep.subr.mxu0 0.0
    %1092 = vmatpush1.xpose.msra.mxu0 0.0
    %1093 = vmatprep.subr.mxu0 0.0
    %1094 = vmatpush1.xpose.msra.mxu0 0.0
    %1095 = vmatprep.subr.mxu0 0.0
    %1096 = vmatpush1.xpose.msra.mxu0 0.0
    %1097 = vmatprep.subr.mxu0 0.0
    %1098 = vmatpush1.xpose.msra.mxu0 0.0
    %1099 = vmatprep.subr.mxu0 0.0
    %1100 = vmatpush1.xpose.msra.mxu0 0.0
    %1101 = vmatprep.subr.mxu0 0.0
    %1102 = vmatpush1.xpose.msra.mxu0 0.0
    %1103 = vmatprep.mubr.f32.mxu0 0.0
    %1104 = vmatmul.mubr.f32.gmra.mrb[0].mxu0 %v1034
    %v1105 = vpop.f32.mrb[0].mxu0
    %v1106 = vadd.f32 0.0, %v1105
    %v1107 = vpop.f32.mrb[0].mxu0
    %1108 = vdwg.mxu0
    %v1109 = vmul.f32 %v1030, 0.25
    %v1110 = vmul.f32 %v1106, 0.25
    %v1111 = vsel %vm511, %v1109, -10000.0
    %v1112 = vsel %vm511, %v1110, -10000.0
    %v1113 = vadd.f32 %v1111, %v519
    %v1114 = vadd.f32 %v1112, %v523
    %v1115 = vsel %vm528, %v1113, -inf
    %1116 = vmax.xlane.f32.xlu0 %v1115
    %v1117 = vpop.xlane.xlu0 %1116
    %v1118 = vsel %vm528, %v1114, -inf
    %1119 = vmax.xlane.f32.xlu0 %v1118
    %v1120 = vpop.xlane.xlu0 %1119
    %v1121 = vsub.f32 %v1113, %v1117
    %v1122 = vsub.f32 %v1114, %v1120
    %v1123 = vmul.f32 %v1121, 1.442695
    %v1124 = vpow.pop %v1123
    %v1125 = vmul.f32 %v1122, 1.442695
    %v1126 = vpow.pop %v1125
    %v1127 = vsel %vm528, %v1124, 0.0
    %1128 = vadd.xlane.f32.xlu0 %v1127
    %v1129 = vpop.xlane.xlu0 %1128
    %v1130 = vsel %vm528, %v1126, 0.0
    %1131 = vadd.xlane.f32.xlu0 %v1130
    %v1132 = vpop.xlane.xlu0 %1131
    %v1133 = vrcp.pop %v1129
    %v1134 = vmul.f32 %v1124, %v1133
    %v1135 = vrcp.pop %v1132
    %v1136 = vmul.f32 %v1126, %v1135
    %v1138 = vsel %vm528, %v1134, 0
    %1140 = vmatprep.subr.mxu0 0.0
    %1141 = vmatpush1.msra.mxu0 %v949
    %1142 = vmatprep.subr.mxu0 0.0
    %1143 = vmatpush1.msra.mxu0 0.0
    %1144 = vmatprep.subr.mxu0 0.0
    %1145 = vmatpush1.msra.mxu0 0.0
    %1146 = vmatprep.subr.mxu0 0.0
    %1147 = vmatpush1.msra.mxu0 0.0
    %1148 = vmatprep.subr.mxu0 0.0
    %1149 = vmatpush1.msra.mxu0 0.0
    %1150 = vmatprep.subr.mxu0 0.0
    %1151 = vmatpush1.msra.mxu0 0.0
    %1152 = vmatprep.subr.mxu0 0.0
    %1153 = vmatpush1.msra.mxu0 0.0
    %1154 = vmatprep.subr.mxu0 0.0
    %1155 = vmatpush1.msra.mxu0 0.0
    %1156 = vmatprep.subr.mxu0 0.0
    %1157 = vmatpush1.msra.mxu0 0.0
    %1158 = vmatprep.subr.mxu0 0.0
    %1159 = vmatpush1.msra.mxu0 0.0
    %1160 = vmatprep.subr.mxu0 0.0
    %1161 = vmatpush1.msra.mxu0 0.0
    %1162 = vmatprep.subr.mxu0 0.0
    %1163 = vmatpush1.msra.mxu0 0.0
    %1164 = vmatprep.subr.mxu0 0.0
    %1165 = vmatpush1.msra.mxu0 0.0
    %1166 = vmatprep.subr.mxu0 0.0
    %1167 = vmatpush1.msra.mxu0 0.0
    %1168 = vmatprep.subr.mxu0 0.0
    %1169 = vmatpush1.msra.mxu0 0.0
    %1170 = vmatprep.subr.mxu0 0.0
    %1171 = vmatpush1.msra.mxu0 0.0
    %1172 = vmatprep.subr.mxu0 0.0
    %1173 = vmatpush1.msra.mxu0 0.0
    %1174 = vmatprep.subr.mxu0 0.0
    %1175 = vmatpush1.msra.mxu0 0.0
    %1176 = vmatprep.subr.mxu0 0.0
    %1177 = vmatpush1.msra.mxu0 0.0
    %1178 = vmatprep.subr.mxu0 0.0
    %1179 = vmatpush1.msra.mxu0 0.0
    %1180 = vmatprep.subr.mxu0 0.0
    %1181 = vmatpush1.msra.mxu0 0.0
    %1182 = vmatprep.subr.mxu0 0.0
    %1183 = vmatpush1.msra.mxu0 0.0
    %1184 = vmatprep.subr.mxu0 0.0
    %1185 = vmatpush1.msra.mxu0 0.0
    %1186 = vmatprep.subr.mxu0 0.0
    %1187 = vmatpush1.msra.mxu0 0.0
    %1188 = vmatprep.subr.mxu0 0.0
    %1189 = vmatpush1.msra.mxu0 0.0
    %1190 = vmatprep.subr.mxu0 0.0
    %1191 = vmatpush1.msra.mxu0 0.0
    %1192 = vmatprep.subr.mxu0 0.0
    %1193 = vmatpush1.msra.mxu0 0.0
    %1194 = vmatprep.subr.mxu0 0.0
    %1195 = vmatpush1.msra.mxu0 0.0
    %1196 = vmatprep.subr.mxu0 0.0
    %1197 = vmatpush1.msra.mxu0 0.0
    %1198 = vmatprep.subr.mxu0 0.0
    %1199 = vmatpush1.msra.mxu0 0.0
    %1200 = vmatprep.subr.mxu0 0.0
    %1201 = vmatpush1.msra.mxu0 0.0
    %1202 = vmatprep.subr.mxu0 0.0
    %1203 = vmatpush1.msra.mxu0 0.0
    %1204 = vmatprep.mubr.f32.mxu0 0.0
    %1205 = vmatmul.mubr.f32.gmra.mrb[0].mxu0 %v1138
    %v1206 = vpop.f32.mrb[0].mxu0
    %v1207 = vadd.f32 0.0, %v1206
    %v1208 = vpop.f32.mrb[0].mxu0
    %1209 = vdwg.mxu0
    %v1211 = vsel %vm528, %v1136, 0
    %1213 = vmatprep.subr.mxu0 0.0
    %1214 = vmatpush1.msra.mxu0 %v954
    %1215 = vmatprep.subr.mxu0 0.0
    %1216 = vmatpush1.msra.mxu0 0.0
    %1217 = vmatprep.subr.mxu0 0.0
    %1218 = vmatpush1.msra.mxu0 0.0
    %1219 = vmatprep.subr.mxu0 0.0
    %1220 = vmatpush1.msra.mxu0 0.0
    %1221 = vmatprep.subr.mxu0 0.0
    %1222 = vmatpush1.msra.mxu0 0.0
    %1223 = vmatprep.subr.mxu0 0.0
    %1224 = vmatpush1.msra.mxu0 0.0
    %1225 = vmatprep.subr.mxu0 0.0
    %1226 = vmatpush1.msra.mxu0 0.0
    %1227 = vmatprep.subr.mxu0 0.0
    %1228 = vmatpush1.msra.mxu0 0.0
    %1229 = vmatprep.subr.mxu0 0.0
    %1230 = vmatpush1.msra.mxu0 0.0
    %1231 = vmatprep.subr.mxu0 0.0
    %1232 = vmatpush1.msra.mxu0 0.0
    %1233 = vmatprep.subr.mxu0 0.0
    %1234 = vmatpush1.msra.mxu0 0.0
    %1235 = vmatprep.subr.mxu0 0.0
    %1236 = vmatpush1.msra.mxu0 0.0
    %1237 = vmatprep.subr.mxu0 0.0
    %1238 = vmatpush1.msra.mxu0 0.0
    %1239 = vmatprep.subr.mxu0 0.0
    %1240 = vmatpush1.msra.mxu0 0.0
    %1241 = vmatprep.subr.mxu0 0.0
    %1242 = vmatpush1.msra.mxu0 0.0
    %1243 = vmatprep.subr.mxu0 0.0
    %1244 = vmatpush1.msra.mxu0 0.0
    %1245 = vmatprep.subr.mxu0 0.0
    %1246 = vmatpush1.msra.mxu0 0.0
    %1247 = vmatprep.subr.mxu0 0.0
    %1248 = vmatpush1.msra.mxu0 0.0
    %1249 = vmatprep.subr.mxu0 0.0
    %1250 = vmatpush1.msra.mxu0 0.0
    %1251 = vmatprep.subr.mxu0 0.0
    %1252 = vmatpush1.msra.mxu0 0.0
    %1253 = vmatprep.subr.mxu0 0.0
    %1254 = vmatpush1.msra.mxu0 0.0
    %1255 = vmatprep.subr.mxu0 0.0
    %1256 = vmatpush1.msra.mxu0 0.0
    %1257 = vmatprep.subr.mxu0 0.0
    %1258 = vmatpush1.msra.mxu0 0.0
    %1259 = vmatprep.subr.mxu0 0.0
    %1260 = vmatpush1.msra.mxu0 0.0
    %1261 = vmatprep.subr.mxu0 0.0
    %1262 = vmatpush1.msra.mxu0 0.0
    %1263 = vmatprep.subr.mxu0 0.0
    %1264 = vmatpush1.msra.mxu0 0.0
    %1265 = vmatprep.subr.mxu0 0.0
    %1266 = vmatpush1.msra.mxu0 0.0
    %1267 = vmatprep.subr.mxu0 0.0
    %1268 = vmatpush1.msra.mxu0 0.0
    %1269 = vmatprep.subr.mxu0 0.0
    %1270 = vmatpush1.msra.mxu0 0.0
    %1271 = vmatprep.subr.mxu0 0.0
    %1272 = vmatpush1.msra.mxu0 0.0
    %1273 = vmatprep.subr.mxu0 0.0
    %1274 = vmatpush1.msra.mxu0 0.0
    %1275 = vmatprep.subr.mxu0 0.0
    %1276 = vmatpush1.msra.mxu0 0.0
    %1277 = vmatprep.mubr.f32.mxu0 0.0
    %1278 = vmatmul.mubr.f32.gmra.mrb[0].mxu0 %v1211
    %v1279 = vpop.f32.mrb[0].mxu0
    %v1280 = vadd.f32 0.0, %v1279
    %v1281 = vpop.f32.mrb[0].mxu0
    %1282 = vdwg.mxu0
    %s1283 = scalar_lea.vmem [#allocation5], 224
    %v1284 = vld [vmem:[%s1283] sm:$0xff]
    %v1285 = vld [vmem:[%s1283 + $0x8] sm:$0xff]
    %v1286 = vld [vmem:[%s1283 + $0x10] sm:$0xff]
    %v1287 = vld [vmem:[%s1283 + $0x18] sm:$0xff]
    %v1289 = vsel %vm104, %v1207, 0
    %v1292 = vsel %vm104, %v1280, 0
    %1294 = vmatprep.subr.mxu0 0.0
    %1295 = vmatpush1.msra.mxu0 %v1284
    %1296 = vmatprep.subr.mxu0 0.0
    %1297 = vmatpush1.msra.mxu0 %v1285
    %1298 = vmatprep.subr.mxu0 0.0
    %1299 = vmatpush1.msra.mxu0 %v1286
    %1300 = vmatprep.subr.mxu0 0.0
    %1301 = vmatpush1.msra.mxu0 %v1287
    %1302 = vmatprep.subr.mxu0 0.0
    %1303 = vmatpush1.msra.mxu0 0.0
    %1304 = vmatprep.subr.mxu0 0.0
    %1305 = vmatpush1.msra.mxu0 0.0
    %1306 = vmatprep.subr.mxu0 0.0
    %1307 = vmatpush1.msra.mxu0 0.0
    %1308 = vmatprep.subr.mxu0 0.0
    %1309 = vmatpush1.msra.mxu0 0.0
    %1310 = vmatprep.subr.mxu0 0.0
    %1311 = vmatpush1.msra.mxu0 0.0
    %1312 = vmatprep.subr.mxu0 0.0
    %1313 = vmatpush1.msra.mxu0 0.0
    %1314 = vmatprep.subr.mxu0 0.0
    %1315 = vmatpush1.msra.mxu0 0.0
    %1316 = vmatprep.subr.mxu0 0.0
    %1317 = vmatpush1.msra.mxu0 0.0
    %1318 = vmatprep.subr.mxu0 0.0
    %1319 = vmatpush1.msra.mxu0 0.0
    %1320 = vmatprep.subr.mxu0 0.0
    %1321 = vmatpush1.msra.mxu0 0.0
    %1322 = vmatprep.subr.mxu0 0.0
    %1323 = vmatpush1.msra.mxu0 0.0
    %1324 = vmatprep.subr.mxu0 0.0
    %1325 = vmatpush1.msra.mxu0 0.0
    %1326 = vmatprep.subr.mxu0 0.0
    %1327 = vmatpush1.msra.mxu0 0.0
    %1328 = vmatprep.subr.mxu0 0.0
    %1329 = vmatpush1.msra.mxu0 0.0
    %1330 = vmatprep.subr.mxu0 0.0
    %1331 = vmatpush1.msra.mxu0 0.0
    %1332 = vmatprep.subr.mxu0 0.0
    %1333 = vmatpush1.msra.mxu0 0.0
    %1334 = vmatprep.subr.mxu0 0.0
    %1335 = vmatpush1.msra.mxu0 0.0
    %1336 = vmatprep.subr.mxu0 0.0
    %1337 = vmatpush1.msra.mxu0 0.0
    %1338 = vmatprep.subr.mxu0 0.0
    %1339 = vmatpush1.msra.mxu0 0.0
    %1340 = vmatprep.subr.mxu0 0.0
    %1341 = vmatpush1.msra.mxu0 0.0
    %1342 = vmatprep.subr.mxu0 0.0
    %1343 = vmatpush1.msra.mxu0 0.0
    %1344 = vmatprep.subr.mxu0 0.0
    %1345 = vmatpush1.msra.mxu0 0.0
    %1346 = vmatprep.subr.mxu0 0.0
    %1347 = vmatpush1.msra.mxu0 0.0
    %1348 = vmatprep.subr.mxu0 0.0
    %1349 = vmatpush1.msra.mxu0 0.0
    %1350 = vmatprep.subr.mxu0 0.0
    %1351 = vmatpush1.msra.mxu0 0.0
    %1352 = vmatprep.subr.mxu0 0.0
    %1353 = vmatpush1.msra.mxu0 0.0
    %1354 = vmatprep.subr.mxu0 0.0
    %1355 = vmatpush1.msra.mxu0 0.0
    %1356 = vmatprep.subr.mxu0 0.0
    %1357 = vmatpush1.msra.mxu0 0.0
    %1358 = vmatprep.mubr.f32.mxu0 0.0
    %1359 = vmatmul.mubr.f32.gmra.mrb[0].mxu0 %v1289
    %v1360 = vpop.f32.mrb[0].mxu0
    %v1361 = vadd.f32 0.0, %v1360
    %v1362 = vpop.f32.mrb[0].mxu0
    %1363 = vmatprep.mubr.f32.mxu0 0.0
    %1364 = vmatmul.mubr.f32.gmra.mrb[0].mxu0 %v1292
    %v1365 = vpop.f32.mrb[0].mxu0
    %v1366 = vadd.f32 0.0, %v1365
    %v1367 = vpop.f32.mrb[0].mxu0
    %1368 = vdwg.mxu0
    %v1370 = vsel %vm104, %v621, 0
    %v1373 = vsel %vm104, %v694, 0
    %1375 = vmatprep.subr.mxu0 0.0
    %1376 = vmatpush1.msra.mxu0 %v698
    %1377 = vmatprep.subr.mxu0 0.0
    %1378 = vmatpush1.msra.mxu0 %v699
    %1379 = vmatprep.subr.mxu0 0.0
    %1380 = vmatpush1.msra.mxu0 %v700
    %1381 = vmatprep.subr.mxu0 0.0
    %1382 = vmatpush1.msra.mxu0 %v701
    %1383 = vmatprep.subr.mxu0 0.0
    %1384 = vmatpush1.msra.mxu0 0.0
    %1385 = vmatprep.subr.mxu0 0.0
    %1386 = vmatpush1.msra.mxu0 0.0
    %1387 = vmatprep.subr.mxu0 0.0
    %1388 = vmatpush1.msra.mxu0 0.0
    %1389 = vmatprep.subr.mxu0 0.0
    %1390 = vmatpush1.msra.mxu0 0.0
    %1391 = vmatprep.subr.mxu0 0.0
    %1392 = vmatpush1.msra.mxu0 0.0
    %1393 = vmatprep.subr.mxu0 0.0
    %1394 = vmatpush1.msra.mxu0 0.0
    %1395 = vmatprep.subr.mxu0 0.0
    %1396 = vmatpush1.msra.mxu0 0.0
    %1397 = vmatprep.subr.mxu0 0.0
    %1398 = vmatpush1.msra.mxu0 0.0
    %1399 = vmatprep.subr.mxu0 0.0
    %1400 = vmatpush1.msra.mxu0 0.0
    %1401 = vmatprep.subr.mxu0 0.0
    %1402 = vmatpush1.msra.mxu0 0.0
    %1403 = vmatprep.subr.mxu0 0.0
    %1404 = vmatpush1.msra.mxu0 0.0
    %1405 = vmatprep.subr.mxu0 0.0
    %1406 = vmatpush1.msra.mxu0 0.0
    %1407 = vmatprep.subr.mxu0 0.0
    %1408 = vmatpush1.msra.mxu0 0.0
    %1409 = vmatprep.subr.mxu0 0.0
    %1410 = vmatpush1.msra.mxu0 0.0
    %1411 = vmatprep.subr.mxu0 0.0
    %1412 = vmatpush1.msra.mxu0 0.0
    %1413 = vmatprep.subr.mxu0 0.0
    %1414 = vmatpush1.msra.mxu0 0.0
    %1415 = vmatprep.subr.mxu0 0.0
    %1416 = vmatpush1.msra.mxu0 0.0
    %1417 = vmatprep.subr.mxu0 0.0
    %1418 = vmatpush1.msra.mxu0 0.0
    %1419 = vmatprep.subr.mxu0 0.0
    %1420 = vmatpush1.msra.mxu0 0.0
    %1421 = vmatprep.subr.mxu0 0.0
    %1422 = vmatpush1.msra.mxu0 0.0
    %1423 = vmatprep.subr.mxu0 0.0
    %1424 = vmatpush1.msra.mxu0 0.0
    %1425 = vmatprep.subr.mxu0 0.0
    %1426 = vmatpush1.msra.mxu0 0.0
    %1427 = vmatprep.subr.mxu0 0.0
    %1428 = vmatpush1.msra.mxu0 0.0
    %1429 = vmatprep.subr.mxu0 0.0
    %1430 = vmatpush1.msra.mxu0 0.0
    %1431 = vmatprep.subr.mxu0 0.0
    %1432 = vmatpush1.msra.mxu0 0.0
    %1433 = vmatprep.subr.mxu0 0.0
    %1434 = vmatpush1.msra.mxu0 0.0
    %1435 = vmatprep.subr.mxu0 0.0
    %1436 = vmatpush1.msra.mxu0 0.0
    %1437 = vmatprep.subr.mxu0 0.0
    %1438 = vmatpush1.msra.mxu0 0.0
    %1439 = vmatprep.mubr.f32.mxu0 0.0
    %1440 = vmatmul.mubr.f32.gmra.mrb[0].mxu0 %v1370
    %v1441 = vpop.f32.mrb[0].mxu0
    %v1442 = vadd.f32 %v1361, %v1441
    %v1443 = vpop.f32.mrb[0].mxu0
    %1444 = vmatprep.mubr.f32.mxu0 0.0
    %1445 = vmatmul.mubr.f32.gmra.mrb[0].mxu0 %v1373
    %v1446 = vpop.f32.mrb[0].mxu0
    %v1447 = vadd.f32 %v1366, %v1446
    %v1448 = vpop.f32.mrb[0].mxu0
    %1449 = vdwg.mxu0
    %v1450 = vadd.f32 %v59, %v1442
    %v1451 = vadd.f32 %v60, %v1447
    %v1452 = vld [vmem:[#allocation7 + $0x6] sm:$0x1]
    %v1453 = vlaneseq
    %v1454 = vshrl.u32 %v1453, 7
    %v1455 = vsub.s32 0, %v1454
    %v1456 = vrot.slane %v1452, %v1455
    %v1457 = vadd.f32 %v1450, %v1456
    %v1458 = vadd.f32 %v1451, %v1456
    %v1459 = vld [vmem:[#allocation7 + $0x7] sm:$0x1]
    %v1460 = vld [vmem:[#allocation7 + $0x8] sm:$0x1]
    %v1461 = vsel %vm104, %v1457, 0.0
    %1462 = vadd.xlane.f32.xlu0 %v1461
    %v1463 = vpop.xlane.xlu0 %1462
    %v1464 = vsel %vm104, %v1458, 0.0
    %1465 = vadd.xlane.f32.xlu0 %v1464
    %v1466 = vpop.xlane.xlu0 %1465
    %v1467 = vrcp.pop 32.0
    %v1468 = vmul.f32 %v1463, %v1467
    %v1469 = vmul.f32 %v1466, %v1467
    %v1470 = vsub.f32 %v1457, %v1468
    %v1471 = vsub.f32 %v1458, %v1469
    %v1472 = vmul.f32 %v1470, %v1470
    %v1473 = vmul.f32 %v1471, %v1471
    %v1474 = vsel %vm104, %v1472, 0.0
    %1475 = vadd.xlane.f32.xlu0 %v1474
    %v1476 = vpop.xlane.xlu0 %1475
    %v1477 = vsel %vm104, %v1473, 0.0
    %1478 = vadd.xlane.f32.xlu0 %v1477
    %v1479 = vpop.xlane.xlu0 %1478
    %v1480 = vmul.f32 %v1476, %v1467
    %v1481 = vmul.f32 %v1479, %v1467
    %v1482 = vadd.f32 %v1480, 1e-05
    %v1483 = vadd.f32 %v1481, 1e-05
    %v1484 = vrsqrt.pop %v1482
    %v1485 = vrsqrt.pop %v1483
    %v1486 = vmul.f32 %v1470, %v1484
    %v1487 = vmul.f32 %v1471, %v1485
    %v1488 = vlaneseq
    %v1489 = vshrl.u32 %v1488, 7
    %v1490 = vsub.s32 0, %v1489
    %v1491 = vrot.slane %v1459, %v1490
    %v1492 = vmul.f32 %v1486, %v1491
    %v1493 = vmul.f32 %v1487, %v1491
    %v1494 = vlaneseq
    %v1495 = vshrl.u32 %v1494, 7
    %v1496 = vsub.s32 0, %v1495
    %v1497 = vrot.slane %v1460, %v1496
    %v1498 = vadd.f32 %v1492, %v1497
    %v1499 = vadd.f32 %v1493, %v1497
    %s1500 = scalar_lea.vmem [#allocation5], 256
    %v1501 = vld [vmem:[%s1500] sm:$0xff]
    %v1502 = vld [vmem:[%s1500 + $0x8] sm:$0xff]
    %v1503 = vld [vmem:[%s1500 + $0x10] sm:$0xff]
    %v1504 = vld [vmem:[%s1500 + $0x18] sm:$0xff]
    %v1505 = vld [vmem:[#allocation7 + $0x9] sm:$0x1]
    %v1506 = vlaneseq
    %v1507 = vshrl.u32 %v1506, 7
    %v1508 = vsub.s32 0, %v1507
    %v1509 = vrot.slane %v1505, %v1508
    %v1511 = vsel %vm104, %v1498, 0
    %v1514 = vsel %vm104, %v1499, 0
    %1516 = vmatprep.subr.mxu0 0.0
    %1517 = vmatpush1.msra.mxu0 %v1501
    %1518 = vmatprep.subr.mxu0 0.0
    %1519 = vmatpush1.msra.mxu0 %v1502
    %1520 = vmatprep.subr.mxu0 0.0
    %1521 = vmatpush1.msra.mxu0 %v1503
    %1522 = vmatprep.subr.mxu0 0.0
    %1523 = vmatpush1.msra.mxu0 %v1504
    %1524 = vmatprep.subr.mxu0 0.0
    %1525 = vmatpush1.msra.mxu0 0.0
    %1526 = vmatprep.subr.mxu0 0.0
    %1527 = vmatpush1.msra.mxu0 0.0
    %1528 = vmatprep.subr.mxu0 0.0
    %1529 = vmatpush1.msra.mxu0 0.0
    %1530 = vmatprep.subr.mxu0 0.0
    %1531 = vmatpush1.msra.mxu0 0.0
    %1532 = vmatprep.subr.mxu0 0.0
    %1533 = vmatpush1.msra.mxu0 0.0
    %1534 = vmatprep.subr.mxu0 0.0
    %1535 = vmatpush1.msra.mxu0 0.0
    %1536 = vmatprep.subr.mxu0 0.0
    %1537 = vmatpush1.msra.mxu0 0.0
    %1538 = vmatprep.subr.mxu0 0.0
    %1539 = vmatpush1.msra.mxu0 0.0
    %1540 = vmatprep.subr.mxu0 0.0
    %1541 = vmatpush1.msra.mxu0 0.0
    %1542 = vmatprep.subr.mxu0 0.0
    %1543 = vmatpush1.msra.mxu0 0.0
    %1544 = vmatprep.subr.mxu0 0.0
    %1545 = vmatpush1.msra.mxu0 0.0
    %1546 = vmatprep.subr.mxu0 0.0
    %1547 = vmatpush1.msra.mxu0 0.0
    %1548 = vmatprep.subr.mxu0 0.0
    %1549 = vmatpush1.msra.mxu0 0.0
    %1550 = vmatprep.subr.mxu0 0.0
    %1551 = vmatpush1.msra.mxu0 0.0
    %1552 = vmatprep.subr.mxu0 0.0
    %1553 = vmatpush1.msra.mxu0 0.0
    %1554 = vmatprep.subr.mxu0 0.0
    %1555 = vmatpush1.msra.mxu0 0.0
    %1556 = vmatprep.subr.mxu0 0.0
    %1557 = vmatpush1.msra.mxu0 0.0
    %1558 = vmatprep.subr.mxu0 0.0
    %1559 = vmatpush1.msra.mxu0 0.0
    %1560 = vmatprep.subr.mxu0 0.0
    %1561 = vmatpush1.msra.mxu0 0.0
    %1562 = vmatprep.subr.mxu0 0.0
    %1563 = vmatpush1.msra.mxu0 0.0
    %1564 = vmatprep.subr.mxu0 0.0
    %1565 = vmatpush1.msra.mxu0 0.0
    %1566 = vmatprep.subr.mxu0 0.0
    %1567 = vmatpush1.msra.mxu0 0.0
    %1568 = vmatprep.subr.mxu0 0.0
    %1569 = vmatpush1.msra.mxu0 0.0
    %1570 = vmatprep.subr.mxu0 0.0
    %1571 = vmatpush1.msra.mxu0 0.0
    %1572 = vmatprep.subr.mxu0 0.0
    %1573 = vmatpush1.msra.mxu0 0.0
    %1574 = vmatprep.subr.mxu0 0.0
    %1575 = vmatpush1.msra.mxu0 0.0
    %1576 = vmatprep.subr.mxu0 0.0
    %1577 = vmatpush1.msra.mxu0 0.0
    %1578 = vmatprep.subr.mxu0 0.0
    %1579 = vmatpush1.msra.mxu0 0.0
    %1580 = vmatprep.mubr.f32.mxu0 0.0
    %1581 = vmatmul.mubr.f32.gmra.mrb[0].mxu0 %v1511
    %v1582 = vpop.f32.mrb[0].mxu0
    %v1583 = vadd.f32 %v1509, %v1582
    %v1584 = vpop.f32.mrb[0].mxu0
    %1585 = vmatprep.mubr.f32.mxu0 0.0
    %1586 = vmatmul.mubr.f32.gmra.mrb[0].mxu0 %v1514
    %v1587 = vpop.f32.mrb[0].mxu0
    %v1588 = vadd.f32 %v1509, %v1587
    %v1589 = vpop.f32.mrb[0].mxu0
    %1590 = vdwg.mxu0
    %v1591 = vmul.f32 %v1583, 0.5
    %v1592 = vmul.f32 %v1588, 0.5
    %v1593 = vmul.f32 %v1583, 0.70710677
    %v1594 = vmul.f32 %v1588, 0.70710677
    %v1595 = vand.u32 2147483647, %v1593
    %v1596 = vand.u32 2147483647, %v1594
    %v1597 = vmul.f32 %v1595, 0.3275911
    %v1598 = vmul.f32 %v1596, 0.3275911
    %v1599 = vadd.f32 %v1597, 1.0
    %v1600 = vadd.f32 %v1598, 1.0
    %v1601 = vrcp.pop %v1599
    %v1602 = vmul.f32 1.0, %v1601
    %v1603 = vrcp.pop %v1600
    %v1604 = vmul.f32 1.0, %v1603
    %v1605 = vmul.f32 %v1602, 1.0614054
    %v1606 = vmul.f32 %v1604, 1.0614054
    %v1607 = vadd.f32 %v1605, -1.4531521
    %v1608 = vadd.f32 %v1606, -1.4531521
    %v1609 = vmul.f32 %v1607, %v1602
    %v1610 = vmul.f32 %v1608, %v1604
    %v1611 = vadd.f32 %v1609, 1.4214138
    %v1612 = vadd.f32 %v1610, 1.4214138
    %v1613 = vmul.f32 %v1611, %v1602
    %v1614 = vmul.f32 %v1612, %v1604
    %v1615 = vadd.f32 %v1613, -0.28449672
    %v1616 = vadd.f32 %v1614, -0.28449672
    %v1617 = vmul.f32 %v1615, %v1602
    %v1618 = vmul.f32 %v1616, %v1604
    %v1619 = vadd.f32 %v1617, 0.2548296
    %v1620 = vadd.f32 %v1618, 0.2548296
    %v1621 = vmul.f32 %v1619, %v1602
    %v1622 = vmul.f32 %v1620, %v1604
    %v1623 = vsub.f32 0.0, %v1595
    %v1624 = vsub.f32 0.0, %v1596
    %v1625 = vmul.f32 %v1623, %v1595
    %v1626 = vmul.f32 %v1624, %v1596
    %v1627 = vmul.f32 %v1625, 1.442695
    %v1628 = vpow.pop %v1627
    %v1629 = vmul.f32 %v1626, 1.442695
    %v1630 = vpow.pop %v1629
    %v1631 = vmul.f32 %v1621, %v1628
    %v1632 = vmul.f32 %v1622, %v1630
    %v1633 = vsub.f32 1.0, %v1631
    %v1634 = vsub.f32 1.0, %v1632
    %vm1635 = vcmp.ge.f32.partialorder %v1593, 0.0
    %vm1636 = vcmp.ge.f32.partialorder %v1594, 0.0
    %v1637 = vsub.f32 0.0, %v1633
    %v1638 = vsub.f32 0.0, %v1634
    %v1639 = vsel %vm1635, %v1633, %v1637
    %v1640 = vsel %vm1636, %v1634, %v1638
    %v1641 = vadd.f32 %v1639, 1.0
    %v1642 = vadd.f32 %v1640, 1.0
    %v1643 = vmul.f32 %v1591, %v1641
    %v1644 = vmul.f32 %v1592, %v1642
    %s1645 = scalar_lea.vmem [#allocation5], 288
    %v1646 = vld [vmem:[%s1645] sm:$0xff]
    %v1647 = vld [vmem:[%s1645 + $0x8] sm:$0xff]
    %v1648 = vld [vmem:[%s1645 + $0x10] sm:$0xff]
    %v1649 = vld [vmem:[%s1645 + $0x18] sm:$0xff]
    %v1650 = vld [vmem:[#allocation7 + $0xa] sm:$0x1]
    %v1651 = vlaneseq
    %v1652 = vshrl.u32 %v1651, 7
    %v1653 = vsub.s32 0, %v1652
    %v1654 = vrot.slane %v1650, %v1653
    %v1656 = vsel %vm104, %v1643, 0
    %v1659 = vsel %vm104, %v1644, 0
    %1661 = vmatprep.subr.mxu0 0.0
    %1662 = vmatpush1.msra.mxu0 %v1646
    %1663 = vmatprep.subr.mxu0 0.0
    %1664 = vmatpush1.msra.mxu0 %v1647
    %1665 = vmatprep.subr.mxu0 0.0
    %1666 = vmatpush1.msra.mxu0 %v1648
    %1667 = vmatprep.subr.mxu0 0.0
    %1668 = vmatpush1.msra.mxu0 %v1649
    %1669 = vmatprep.subr.mxu0 0.0
    %1670 = vmatpush1.msra.mxu0 0.0
    %1671 = vmatprep.subr.mxu0 0.0
    %1672 = vmatpush1.msra.mxu0 0.0
    %1673 = vmatprep.subr.mxu0 0.0
    %1674 = vmatpush1.msra.mxu0 0.0
    %1675 = vmatprep.subr.mxu0 0.0
    %1676 = vmatpush1.msra.mxu0 0.0
    %1677 = vmatprep.subr.mxu0 0.0
    %1678 = vmatpush1.msra.mxu0 0.0
    %1679 = vmatprep.subr.mxu0 0.0
    %1680 = vmatpush1.msra.mxu0 0.0
    %1681 = vmatprep.subr.mxu0 0.0
    %1682 = vmatpush1.msra.mxu0 0.0
    %1683 = vmatprep.subr.mxu0 0.0
    %1684 = vmatpush1.msra.mxu0 0.0
    %1685 = vmatprep.subr.mxu0 0.0
    %1686 = vmatpush1.msra.mxu0 0.0
    %1687 = vmatprep.subr.mxu0 0.0
    %1688 = vmatpush1.msra.mxu0 0.0
    %1689 = vmatprep.subr.mxu0 0.0
    %1690 = vmatpush1.msra.mxu0 0.0
    %1691 = vmatprep.subr.mxu0 0.0
    %1692 = vmatpush1.msra.mxu0 0.0
    %1693 = vmatprep.subr.mxu0 0.0
    %1694 = vmatpush1.msra.mxu0 0.0
    %1695 = vmatprep.subr.mxu0 0.0
    %1696 = vmatpush1.msra.mxu0 0.0
    %1697 = vmatprep.subr.mxu0 0.0
    %1698 = vmatpush1.msra.mxu0 0.0
    %1699 = vmatprep.subr.mxu0 0.0
    %1700 = vmatpush1.msra.mxu0 0.0
    %1701 = vmatprep.subr.mxu0 0.0
    %1702 = vmatpush1.msra.mxu0 0.0
    %1703 = vmatprep.subr.mxu0 0.0
    %1704 = vmatpush1.msra.mxu0 0.0
    %1705 = vmatprep.subr.mxu0 0.0
    %1706 = vmatpush1.msra.mxu0 0.0
    %1707 = vmatprep.subr.mxu0 0.0
    %1708 = vmatpush1.msra.mxu0 0.0
    %1709 = vmatprep.subr.mxu0 0.0
    %1710 = vmatpush1.msra.mxu0 0.0
    %1711 = vmatprep.subr.mxu0 0.0
    %1712 = vmatpush1.msra.mxu0 0.0
    %1713 = vmatprep.subr.mxu0 0.0
    %1714 = vmatpush1.msra.mxu0 0.0
    %1715 = vmatprep.subr.mxu0 0.0
    %1716 = vmatpush1.msra.mxu0 0.0
    %1717 = vmatprep.subr.mxu0 0.0
    %1718 = vmatpush1.msra.mxu0 0.0
    %1719 = vmatprep.subr.mxu0 0.0
    %1720 = vmatpush1.msra.mxu0 0.0
    %1721 = vmatprep.subr.mxu0 0.0
    %1722 = vmatpush1.msra.mxu0 0.0
    %1723 = vmatprep.subr.mxu0 0.0
    %1724 = vmatpush1.msra.mxu0 0.0
    %1725 = vmatprep.mubr.f32.mxu0 0.0
    %1726 = vmatmul.mubr.f32.gmra.mrb[0].mxu0 %v1656
    %v1727 = vpop.f32.mrb[0].mxu0
    %v1728 = vadd.f32 %v1654, %v1727
    %v1729 = vpop.f32.mrb[0].mxu0
    %1730 = vmatprep.mubr.f32.mxu0 0.0
    %1731 = vmatmul.mubr.f32.gmra.mrb[0].mxu0 %v1659
    %v1732 = vpop.f32.mrb[0].mxu0
    %v1733 = vadd.f32 %v1654, %v1732
    %v1734 = vpop.f32.mrb[0].mxu0
    %1735 = vdwg.mxu0
    %v1736 = vadd.f32 %v1498, %v1728
    %v1737 = vadd.f32 %v1499, %v1733
    %v1738 = vld [vmem:[#allocation7 + $0xb] sm:$0x1]
    %v1739 = vld [vmem:[#allocation7 + $0xc] sm:$0x1]
    %v1740 = vsel %vm104, %v1736, 0.0
    %1741 = vadd.xlane.f32.xlu0 %v1740
    %v1742 = vpop.xlane.xlu0 %1741
    %v1743 = vsel %vm104, %v1737, 0.0
    %1744 = vadd.xlane.f32.xlu0 %v1743
    %v1745 = vpop.xlane.xlu0 %1744
    %v1746 = vmul.f32 %v1742, %v1467
    %v1747 = vmul.f32 %v1745, %v1467
    %v1748 = vsub.f32 %v1736, %v1746
    %v1749 = vsub.f32 %v1737, %v1747
    %v1750 = vmul.f32 %v1748, %v1748
    %v1751 = vmul.f32 %v1749, %v1749
    %v1752 = vsel %vm104, %v1750, 0.0
    %1753 = vadd.xlane.f32.xlu0 %v1752
    %v1754 = vpop.xlane.xlu0 %1753
    %v1755 = vsel %vm104, %v1751, 0.0
    %1756 = vadd.xlane.f32.xlu0 %v1755
    %v1757 = vpop.xlane.xlu0 %1756
    %v1758 = vmul.f32 %v1754, %v1467
    %v1759 = vmul.f32 %v1757, %v1467
    %v1760 = vadd.f32 %v1758, 1e-05
    %v1761 = vadd.f32 %v1759, 1e-05
    %v1762 = vrsqrt.pop %v1760
    %v1763 = vrsqrt.pop %v1761
    %v1764 = vmul.f32 %v1748, %v1762
    %v1765 = vmul.f32 %v1749, %v1763
    %v1766 = vlaneseq
    %v1767 = vshrl.u32 %v1766, 7
    %v1768 = vsub.s32 0, %v1767
    %v1769 = vrot.slane %v1738, %v1768
    %v1770 = vmul.f32 %v1764, %v1769
    %v1771 = vmul.f32 %v1765, %v1769
    %v1772 = vlaneseq
    %v1773 = vshrl.u32 %v1772, 7
    %v1774 = vsub.s32 0, %v1773
    %v1775 = vrot.slane %v1739, %v1774
    %v1776 = vadd.f32 %v1770, %v1775
    %v1777 = vadd.f32 %v1771, %v1775
    %1778 = vst.msk [vmem:[#allocation8] sm:$0xff] %vm104, %v1776
    %1779 = vst.msk [vmem:[#allocation8 + $0x8] sm:$0xff] %vm104, %v1777
    // Predicated region
    $region30: #{tpu_custom_call.1} parent=1 // pred_check
      _
    $region31: #{tpu_custom_call.1} parent=1 // pred_check_branch
      %1781 = sbr.rel (0) target = $region33
    $region32: #{tpu_custom_call.1} parent=1 // pred_region
      %s1783 = ssub.s32 256, 256
      %1784 = vsyncadd [#allocation4], %s1783
      %s1785 = sshll.u32 [#allocation8], 4
      %s1786 = int_to_ptr.vmem [resolvable:$true] %s1785
      %1791 = dma.vmem_to_hbm [thread:$0]  %s1786, 256, %s4, [#allocation4], 128, 128, 8
    $region33: #{tpu_custom_call.1} parent=1 // pred_fallthru
      _
    // Predicated region
    $region34: #{tpu_custom_call.1} parent=1 // pred_check
      _
    $region35: #{tpu_custom_call.1} parent=1 // pred_check_branch
      %1793 = sbr.rel (0) target = $region37
    $region36: #{tpu_custom_call.1} parent=1 // pred_region
      %1794 = dma.done [#allocation4], 256
    $region37: #{tpu_custom_call.1} parent=1 // pred_fallthru
      _
    %1795 = vsyncpa [#allocation3], 1
    %1796 = vsyncpa [#allocation6], 1
    %1797 = vsyncpa [#allocation4], 1

</llo_original>
